<compile_context>
chip_gen: v6e
topology: v6e:2x2x1
jax: 0.10.0
libtpu: 0.0.40
codegen_flags: <defaults>
</compile_context>

<pallas_src>
import math
import jax
import jax.numpy as jnp
from jax.experimental import pallas as pl
from jax.experimental.pallas import tpu as pltpu


# --------------------------------------------------------------------------
# Kernel
# --------------------------------------------------------------------------
def _sae_kernel(x_ref, we_ref, wd_ref, b_ref,
                act_ref, recon_ref, l1_ref, sq_ref):
    # grid = (batch tiles [parallel], hidden tiles [arbitrary, reduction])
    h = pl.program_id(1)
    nh = pl.num_programs(1)

    x = x_ref[...]                                   # (tb, D) float32
    x_mm = x.astype(we_ref.dtype)                    # bf16 operands for the MXU

    # Encoder: x @ w_enc.T ; w_enc tile is (th, D) in torch layout, so we
    # contract the last dims of both operands (trans_b) -> (tb, th).
    enc = jax.lax.dot_general(
        x_mm, we_ref[...],
        dimension_numbers=(((1,), (1,)), ((), ())),
        preferred_element_type=jnp.float32)
    act = jnp.maximum(enc, 0.0)                      # ReLU, f32
    act_ref[...] = act

    # Lane-dense L1 partial sums for this (i, h) tile: per-feature column sums
    # (sublane reduce only; no carried scalar, so the batch axis stays parallel).
    l1_ref[0] = jnp.sum(act, axis=0, keepdims=True)  # (1, th)

    # Decoder partial: act @ w_dec.T ; w_dec tile is (D, th) -> contract last
    # dims (trans_b) -> (tb, D).
    part = jax.lax.dot_general(
        act.astype(wd_ref.dtype), wd_ref[...],
        dimension_numbers=(((1,), (1,)), ((), ())),
        preferred_element_type=jnp.float32)

    # Accumulate the reconstruction directly in the resident output block.
    @pl.when(h == 0)
    def _():
        recon_ref[...] = part + b_ref[...]

    @pl.when(h > 0)
    def _():
        recon_ref[...] = recon_ref[...] + part

    # On the last hidden tile, emit lane-dense squared-error partial sums.
    @pl.when(h == nh - 1)
    def _():
        diff = recon_ref[...] - x
        sq_ref[0] = jnp.sum(diff * diff, axis=0, keepdims=True)  # (1, D)


# --------------------------------------------------------------------------
# Wrapper
# --------------------------------------------------------------------------
def _round_up(a, m):
    return (a + m - 1) // m * m


def _pick_h_tile(H, target=512):
    """Largest multiple-of-128 divisor of H that is <= target, else H."""
    if H <= target or H % 128 != 0:
        # TODO(synk): very large H that has no multiple-of-128 divisor keeps the
        # full weight resident; pad H instead if that ever matters.
        return H
    cand = (min(target, H) // 128) * 128
    while cand >= 128:
        if H % cand == 0:
            return cand
        cand -= 128
    return H


def sae_forward(x, w_enc, w_dec, b_dec, l1_coeff, *,
                tb=None, th=None, matmul_dtype=jnp.bfloat16):
    """Pallas implementation of SparseAutoencoder.forward.

    x:     [B, input_dim]
    w_enc: [hidden_dim, input_dim]  (torch nn.Linear weight layout)
    w_dec: [input_dim, hidden_dim]  (torch nn.Linear weight layout)
    b_dec: [input_dim]
    Returns (total_loss, reconstruction_loss, l1_loss, activations, reconstructed).
    """
    B, D = x.shape
    H = w_enc.shape[0]
    assert w_enc.shape == (H, D) and w_dec.shape == (D, H) and b_dec.shape == (D,)

    x = x.astype(jnp.float32)
    we = w_enc.astype(matmul_dtype)                  # (H, D), no transpose
    wd = w_dec.astype(matmul_dtype)                  # (D, H), no transpose
    b = b_dec.astype(jnp.float32).reshape(1, D)

    # ---- tile selection --------------------------------------------------
    if tb is None:
        tb = 256                                     # large M keeps the MXU busy
    tb = _round_up(max(8, min(tb, _round_up(B, 8))), 8)
    if th is None:
        th = _pick_h_tile(H)
    assert H % th == 0 and (th % 128 == 0 or th == H)

    n_pad = (-B) % tb
    x_p = jnp.pad(x, ((0, n_pad), (0, 0))) if n_pad else x
    Bp = B + n_pad
    nb, nh = Bp // tb, H // th

    # ---- VMEM budget / cost hint ------------------------------------------
    wbytes = jnp.dtype(matmul_dtype).itemsize
    vmem_est = 2 * (tb * D * 4 + th * D * wbytes + D * th * wbytes + D * 4
                    + tb * th * 4 + tb * D * 4 + th * 4 + D * 4)
    vmem_limit = int(max(vmem_est + (4 << 20), 32 << 20))   # <= 64 MiB on v7x

    cost = pl.CostEstimate(
        flops=int(4 * Bp * D * H),
        transcendentals=0,
        bytes_accessed=int(Bp * D * 4 + 2 * H * D * wbytes + D * 4
                           + Bp * H * 4 + Bp * D * 4 + nb * (H + D) * 4))

    act, recon, l1_part, sq_part = pl.pallas_call(
        _sae_kernel,
        out_shape=(
            jax.ShapeDtypeStruct((Bp, H), jnp.float32),      # activations
            jax.ShapeDtypeStruct((Bp, D), jnp.float32),      # reconstruction
            jax.ShapeDtypeStruct((nb, 1, H), jnp.float32),   # L1 partial sums
            jax.ShapeDtypeStruct((nb, 1, D), jnp.float32),   # sq-err partial sums
        ),
        grid_spec=pltpu.PrefetchScalarGridSpec(
            num_scalar_prefetch=0,
            grid=(nb, nh),
            in_specs=[
                pl.BlockSpec((tb, D), lambda i, h: (i, 0)),   # x
                pl.BlockSpec((th, D), lambda i, h: (h, 0)),   # w_enc tile
                pl.BlockSpec((D, th), lambda i, h: (0, h)),   # w_dec tile
                pl.BlockSpec((1, D), lambda i, h: (0, 0)),    # bias
            ],
            out_specs=[
                pl.BlockSpec((tb, th), lambda i, h: (i, h)),      # act
                pl.BlockSpec((tb, D), lambda i, h: (i, 0)),       # recon (accum)
                pl.BlockSpec((1, 1, th), lambda i, h: (i, 0, h)), # l1 partials
                pl.BlockSpec((1, 1, D), lambda i, h: (i, 0, 0)),  # sq partials
            ],
        ),
        compiler_params=pltpu.CompilerParams(
            dimension_semantics=("parallel", "arbitrary"),
            vmem_limit_bytes=vmem_limit),
        cost_estimate=cost,
    )(x_p, we, wd, b)

    # ---- finish the (tiny) reductions in the wrapper -----------------------
    l1_sum = jnp.sum(l1_part)                        # padded rows contribute 0
    sq_sum = jnp.sum(sq_part)
    if n_pad:
        # Zero-padded rows reconstruct exactly to the decoder bias.
        sq_sum = sq_sum - n_pad * jnp.sum(b_dec.astype(jnp.float32) ** 2)

    reconstruction_loss = sq_sum / (B * D)           # mse over all real elements
    l1_loss = l1_coeff * (l1_sum / B)                # mean over batch of row-L1
    total_loss = reconstruction_loss + l1_loss
    return total_loss, reconstruction_loss, l1_loss, act[:B], recon[:B]


# --------------------------------------------------------------------------
# Init + reference (for the self-test)
# --------------------------------------------------------------------------
def init_params(key, input_dim, hidden_dim):
    """Matches nn.init.kaiming_uniform_(a=sqrt(5)) and zero decoder bias."""
    k_enc, k_dec = jax.random.split(key)
    enc_bound = 1.0 / math.sqrt(input_dim)
    dec_bound = 1.0 / math.sqrt(hidden_dim)
    w_enc = jax.random.uniform(k_enc, (hidden_dim, input_dim),
                               minval=-enc_bound, maxval=enc_bound, dtype=jnp.float32)
    w_dec = jax.random.uniform(k_dec, (input_dim, hidden_dim),
                               minval=-dec_bound, maxval=dec_bound, dtype=jnp.float32)
    b_dec = jnp.zeros((input_dim,), dtype=jnp.float32)
    return w_enc, w_dec, b_dec


def _reference(x, w_enc, w_dec, b_dec, l1_coeff):
    hi = jax.lax.Precision.HIGHEST
    x = x.astype(jnp.float32)
    act = jnp.maximum(jnp.dot(x, w_enc.T, precision=hi), 0.0)
    l1 = l1_coeff * jnp.mean(jnp.sum(jnp.abs(act), axis=-1))
    recon = jnp.dot(act, w_dec.T, precision=hi) + b_dec
    mse = jnp.mean((recon - x) ** 2)
    return mse + l1, mse, l1, act, recon


if __name__ == "__main__":
    # Small but non-trivial: B not a multiple of tb (exercises padding),
    # 2 batch tiles x 2 hidden tiles.
    B, INPUT_DIM, HIDDEN_DIM = 200, 128, 512
    L1_COEFF = 1e-3

    key = jax.random.PRNGKey(0)
    k_x, k_p = jax.random.split(key)
    x = jax.random.normal(k_x, (B, INPUT_DIM), dtype=jnp.float32)
    w_enc, w_dec, b_dec = init_params(k_p, INPUT_DIM, HIDDEN_DIM)

    out = sae_forward(x, w_enc, w_dec, b_dec, L1_COEFF, tb=128, th=256)
    jax.block_until_ready(out)
    total, recon_loss, l1_loss, act, recon = out

    # bf16 MXU operands (f32 accumulation) -> loose tolerance vs f32 reference.
    rt, rr, rl, ra, rc = _reference(x, w_enc, w_dec, b_dec, L1_COEFF)
    assert jnp.allclose(total, rt, rtol=1e-2, atol=1e-3)
    assert jnp.allclose(recon_loss, rr, rtol=1e-2, atol=1e-3)
    assert jnp.allclose(l1_loss, rl, rtol=1e-2, atol=1e-4)
    assert jnp.allclose(act, ra, rtol=3e-2, atol=3e-2)
    assert jnp.allclose(recon, rc, rtol=3e-2, atol=3e-2)

    # Second run with a non-zero decoder bias to exercise the padded-row
    # squared-error correction.
    b_dec2 = 0.1 * jax.random.normal(jax.random.PRNGKey(1), (INPUT_DIM,),
                                     dtype=jnp.float32)
    out2 = sae_forward(x, w_enc, w_dec, b_dec2, L1_COEFF, tb=128, th=256)
    jax.block_until_ready(out2)
    ref2 = _reference(x, w_enc, w_dec, b_dec2, L1_COEFF)
    assert jnp.allclose(out2[0], ref2[0], rtol=1e-2, atol=1e-3)
    assert jnp.allclose(out2[1], ref2[1], rtol=1e-2, atol=1e-3)
    assert jnp.allclose(out2[2], ref2[2], rtol=1e-2, atol=1e-4)
    assert jnp.allclose(out2[3], ref2[3], rtol=3e-2, atol=3e-2)
    assert jnp.allclose(out2[4], ref2[4], rtol=3e-2, atol=3e-2)

    print("KERNEL_OK")
</pallas_src>

<mosaic_0001>
module attributes {stable_mosaic.version = 11 : i64} {
  func.func @_sae_kernel(%arg0: i32, %arg1: i32, %arg2: memref<128x128xf32, #tpu.memory_space<vmem>>, %arg3: memref<256x128xbf16, #tpu.memory_space<vmem>>, %arg4: memref<128x256xbf16, #tpu.memory_space<vmem>>, %arg5: memref<1x128xf32, #tpu.memory_space<vmem>>, %arg6: memref<128x256xf32, #tpu.memory_space<vmem>>, %arg7: memref<128x128xf32, #tpu.memory_space<vmem>>, %arg8: memref<1x1x256xf32, #tpu.memory_space<vmem>>, %arg9: memref<1x1x128xf32, #tpu.memory_space<vmem>>) attributes {dimension_semantics = [#tpu.dimension_semantics<parallel>, #tpu.dimension_semantics<arbitrary>], iteration_bounds = array<i64: 2, 2>, scalar_prefetch = 0 : i64, scratch_operands = 0 : i64, tpu.core_type = #tpu.core_type<tc>, window_params = [{transform_indices = @transform_0, window_bounds = array<i64: 128, 128>}, {transform_indices = @transform_1, window_bounds = array<i64: 256, 128>}, {transform_indices = @transform_2, window_bounds = array<i64: 128, 256>}, {pipeline_mode = #tpu.pipeline_mode<synchronous>, transform_indices = @transform_3, window_bounds = array<i64: 1, 128>}, {transform_indices = @transform_4, window_bounds = array<i64: 128, 256>}, {transform_indices = @transform_5, window_bounds = array<i64: 128, 128>}, {transform_indices = @transform_6, window_bounds = array<i64: 1, 1, 256>}, {transform_indices = @transform_7, window_bounds = array<i64: 1, 1, 128>}]} {
    %c0 = arith.constant 0 : index
    %c0_0 = arith.constant 0 : index
    %0 = vector.load %arg2[%c0, %c0_0] : memref<128x128xf32, #tpu.memory_space<vmem>>, vector<128x128xf32>
    %1 = arith.truncf %0 : vector<128x128xf32> to vector<128x128xbf16>
    %c0_1 = arith.constant 0 : index
    %c0_2 = arith.constant 0 : index
    %2 = vector.load %arg3[%c0_1, %c0_2] : memref<256x128xbf16, #tpu.memory_space<vmem>>, vector<256x128xbf16>
    %cst = arith.constant dense<0.000000e+00> : vector<128x256xf32>
    %3 = tpu.matmul %1, %2, %cst {dimension_numbers = #tpu.dot_dimension_numbers<[1], [1], [0], [0], [0, 0, 1, 0], [], []>} : vector<128x128xbf16>, vector<256x128xbf16>, vector<128x256xf32> -> vector<128x256xf32>
    %cst_3 = arith.constant 0.000000e+00 : f32
    %4 = vector.broadcast %cst_3 : f32 to vector<128x256xf32>
    %5 = arith.maximumf %3, %4 : vector<128x256xf32>
    %c0_4 = arith.constant 0 : index
    %c0_5 = arith.constant 0 : index
    %6 = vector.load %arg6[%c0_4, %c0_5] : memref<128x256xf32, #tpu.memory_space<vmem>>, vector<128x256xf32>
    tpu.vector_store %arg6[%c0_4, %c0_5], %5 {strides = array<i32>} : memref<128x256xf32, #tpu.memory_space<vmem>>, vector<128x256xf32>,
    %cst_6 = arith.constant dense<0.000000e+00> : vector<256xf32>
    %7 = vector.multi_reduction <add>, %5, %cst_6 [0] : vector<128x256xf32> to vector<256xf32>
    %8 = vector.shape_cast %7 : vector<256xf32> to vector<1x256xf32>
    %c0_7 = arith.constant 0 : index
    %c0_8 = arith.constant 0 : index
    %c0_9 = arith.constant 0 : index
    %9 = vector.load %arg8[%c0_7, %c0_8, %c0_9] : memref<1x1x256xf32, #tpu.memory_space<vmem>>, vector<1x1x256xf32>
    %10 = vector.shape_cast %9 : vector<1x1x256xf32> to vector<1x256xf32>
    %11 = vector.shape_cast %8 : vector<1x256xf32> to vector<1x1x256xf32>
    tpu.vector_store %arg8[%c0_7, %c0_8, %c0_9], %11 {strides = array<i32>} : memref<1x1x256xf32, #tpu.memory_space<vmem>>, vector<1x1x256xf32>,
    %12 = arith.truncf %5 : vector<128x256xf32> to vector<128x256xbf16>
    %c0_10 = arith.constant 0 : index
    %c0_11 = arith.constant 0 : index
    %13 = vector.load %arg4[%c0_10, %c0_11] : memref<128x256xbf16, #tpu.memory_space<vmem>>, vector<128x256xbf16>
    %cst_12 = arith.constant dense<0.000000e+00> : vector<128x128xf32>
    %14 = tpu.matmul %12, %13, %cst_12 {dimension_numbers = #tpu.dot_dimension_numbers<[1], [1], [0], [0], [0, 0, 1, 0], [], []>} : vector<128x256xbf16>, vector<128x256xbf16>, vector<128x128xf32> -> vector<128x128xf32>
    %c0_i32 = arith.constant 0 : i32
    %15 = arith.cmpi eq, %arg1, %c0_i32 : i32
    %16 = arith.extui %15 : i1 to i32
    %c0_i32_13 = arith.constant 0 : i32
    %17 = arith.cmpi ne, %16, %c0_i32_13 : i32
    scf.if %17 {
      %c0_17 = arith.constant 0 : index
      %c0_18 = arith.constant 0 : index
      %24 = vector.load %arg5[%c0_17, %c0_18] : memref<1x128xf32, #tpu.memory_space<vmem>>, vector<1x128xf32>
      %25 = vector.broadcast %24 : vector<1x128xf32> to vector<128x128xf32>
      %26 = arith.addf %14, %25 : vector<128x128xf32>
      %c0_19 = arith.constant 0 : index
      %c0_20 = arith.constant 0 : index
      %27 = vector.load %arg7[%c0_19, %c0_20] : memref<128x128xf32, #tpu.memory_space<vmem>>, vector<128x128xf32>
      tpu.vector_store %arg7[%c0_19, %c0_20], %26 {strides = array<i32>} : memref<128x128xf32, #tpu.memory_space<vmem>>, vector<128x128xf32>,
    } else {
    }
    %c0_i32_14 = arith.constant 0 : i32
    %18 = arith.cmpi sgt, %arg1, %c0_i32_14 : i32
    %19 = arith.extui %18 : i1 to i32
    %c0_i32_15 = arith.constant 0 : i32
    %20 = arith.cmpi ne, %19, %c0_i32_15 : i32
    scf.if %20 {
      %c0_17 = arith.constant 0 : index
      %c0_18 = arith.constant 0 : index
      %24 = vector.load %arg7[%c0_17, %c0_18] : memref<128x128xf32, #tpu.memory_space<vmem>>, vector<128x128xf32>
      %25 = arith.addf %24, %14 : vector<128x128xf32>
      %c0_19 = arith.constant 0 : index
      %c0_20 = arith.constant 0 : index
      %26 = vector.load %arg7[%c0_19, %c0_20] : memref<128x128xf32, #tpu.memory_space<vmem>>, vector<128x128xf32>
      tpu.vector_store %arg7[%c0_19, %c0_20], %25 {strides = array<i32>} : memref<128x128xf32, #tpu.memory_space<vmem>>, vector<128x128xf32>,
    } else {
    }
    %c1_i32 = arith.constant 1 : i32
    %21 = arith.cmpi eq, %arg1, %c1_i32 : i32
    %22 = arith.extui %21 : i1 to i32
    %c0_i32_16 = arith.constant 0 : i32
    %23 = arith.cmpi ne, %22, %c0_i32_16 : i32
    scf.if %23 {
      %c0_17 = arith.constant 0 : index
      %c0_18 = arith.constant 0 : index
      %24 = vector.load %arg7[%c0_17, %c0_18] : memref<128x128xf32, #tpu.memory_space<vmem>>, vector<128x128xf32>
      %25 = arith.subf %24, %0 : vector<128x128xf32>
      %26 = arith.mulf %25, %25 : vector<128x128xf32>
      %cst_19 = arith.constant dense<0.000000e+00> : vector<128xf32>
      %27 = vector.multi_reduction <add>, %26, %cst_19 [0] : vector<128x128xf32> to vector<128xf32>
      %28 = vector.shape_cast %27 : vector<128xf32> to vector<1x128xf32>
      %c0_20 = arith.constant 0 : index
      %c0_21 = arith.constant 0 : index
      %c0_22 = arith.constant 0 : index
      %29 = vector.load %arg9[%c0_20, %c0_21, %c0_22] : memref<1x1x128xf32, #tpu.memory_space<vmem>>, vector<1x1x128xf32>
      %30 = vector.shape_cast %29 : vector<1x1x128xf32> to vector<1x128xf32>
      %31 = vector.shape_cast %28 : vector<1x128xf32> to vector<1x1x128xf32>
      tpu.vector_store %arg9[%c0_20, %c0_21, %c0_22], %31 {strides = array<i32>} : memref<1x1x128xf32, #tpu.memory_space<vmem>>, vector<1x1x128xf32>,
    } else {
    }
    return
  }
  func.func @transform_0(%arg0: i32, %arg1: i32) -> (i32, i32) {
    %c0_i32 = arith.constant 0 : i32
    %c0_i32_0 = arith.constant 0 : i32
    return %arg0, %c0_i32 : i32, i32
  }
  func.func @transform_1(%arg0: i32, %arg1: i32) -> (i32, i32) {
    %c0_i32 = arith.constant 0 : i32
    %c0_i32_0 = arith.constant 0 : i32
    return %arg1, %c0_i32 : i32, i32
  }
  func.func @transform_2(%arg0: i32, %arg1: i32) -> (i32, i32) {
    %c0_i32 = arith.constant 0 : i32
    %c0_i32_0 = arith.constant 0 : i32
    return %c0_i32, %arg1 : i32, i32
  }
  func.func @transform_3(%arg0: i32, %arg1: i32) -> (i32, i32) {
    %c0_i32 = arith.constant 0 : i32
    %c0_i32_0 = arith.constant 0 : i32
    %c0_i32_1 = arith.constant 0 : i32
    return %c0_i32, %c0_i32_0 : i32, i32
  }
  func.func @transform_4(%arg0: i32, %arg1: i32) -> (i32, i32) {
    %c0_i32 = arith.constant 0 : i32
    return %arg0, %arg1 : i32, i32
  }
  func.func @transform_5(%arg0: i32, %arg1: i32) -> (i32, i32) {
    %c0_i32 = arith.constant 0 : i32
    %c0_i32_0 = arith.constant 0 : i32
    return %arg0, %c0_i32 : i32, i32
  }
  func.func @transform_6(%arg0: i32, %arg1: i32) -> (i32, i32, i32) {
    %c0_i32 = arith.constant 0 : i32
    %c0_i32_0 = arith.constant 0 : i32
    return %arg0, %c0_i32, %arg1 : i32, i32, i32
  }
  func.func @transform_7(%arg0: i32, %arg1: i32) -> (i32, i32, i32) {
    %c0_i32 = arith.constant 0 : i32
    %c0_i32_0 = arith.constant 0 : i32
    %c0_i32_1 = arith.constant 0 : i32
    return %arg0, %c0_i32, %c0_i32_0 : i32, i32, i32
  }
}

</mosaic_0001>

<llo_original>
// kernel: tpu_custom_call.1
$region0: #{tpu_custom_call.1}
  #allocation0 [shape = 'u32[]', space=smem, size = 0x4, offset = 0x4, fixed_abs, tag = 'smem constant byte address 0x4 - core index']
  #allocation1 [shape = 'u32[144,128]{1,0:T(1,128)}', space=vmem, size = 0x12000, scoped, tag = 'internal scratch']
  %s0 = inlined_call_operand.hbm [shape: f32[256,128], index: 0, kind: input, shape index: {}]
  %s1 = inlined_call_operand.hbm [shape: bf16[512,128], index: 1, kind: input, shape index: {}]
  %s2 = inlined_call_operand.hbm [shape: bf16[128,512], index: 2, kind: input, shape index: {}]
  %s3 = inlined_call_operand.vmem [shape: f32[1,128], index: 3, kind: input, shape index: {}]
  %s4 = inlined_call_operand.hbm [shape: f32[256,512], index: 4, kind: output, shape index: {0}]
  %s5 = inlined_call_operand.hbm [shape: f32[256,128], index: 5, kind: output, shape index: {1}]
  %s6 = inlined_call_operand.hbm [shape: f32[2,1,512], index: 6, kind: output, shape index: {2}]
  %s7 = inlined_call_operand.hbm [shape: f32[2,1,128], index: 7, kind: output, shape index: {3}]
  %8 = xla_tuple %s4, %s5, %s6, %s7
  %s9 = sld [smem:[#allocation0]]
  $region97: #{tpu_custom_call.1} parent=0
    _
  %s11 = ssub.s32 1, %s9
  %s12 = scalar_select 0, %s11, %s9
  $region1: #{tpu_custom_call.1} parent=0
    #allocation2 [shape = 'u8[131072]{0}', space=vmem, size = 0x20000, scoped, tag = 'input window, operand 0']
    #allocation3 [shape = 's32[2]{0}', space=sflag, size = 0x8, scoped, tag = 'scoped memory for tpu_custom_call.1']
    #allocation4 [shape = 's32[2]{0}', space=sflag, size = 0x8, scoped, tag = 'scoped memory for tpu_custom_call.1']
    #allocation5 [shape = 'u8[131072]{0}', space=vmem, size = 0x20000, scoped, tag = 'input window, operand 1']
    #allocation6 [shape = 's32[2]{0}', space=sflag, size = 0x8, scoped, tag = 'scoped memory for tpu_custom_call.1']
    #allocation7 [shape = 'u8[131072]{0}', space=vmem, size = 0x20000, scoped, tag = 'input window, operand 2']
    #allocation8 [shape = 'u8[262144]{0}', space=vmem, size = 0x40000, scoped, tag = 'output window, operand 0']
    #allocation9 [shape = 'u8[131072]{0}', space=vmem, size = 0x20000, scoped, tag = 'output window, operand 1']
    #allocation10 [shape = 's32[2]{0}', space=sflag, size = 0x8, scoped, tag = 'scoped memory for tpu_custom_call.1']
    #allocation11 [shape = 'u8[2048]{0}', space=vmem, size = 0x800, scoped, tag = 'output window, operand 2']
    #allocation12 [shape = 'u8[1024]{0}', space=vmem, size = 0x400, scoped, tag = 'output window, operand 3']
    #allocation13 [shape = 's32[2]{0}', space=sflag, size = 0x8, scoped, tag = 'scoped memory for tpu_custom_call.1']
    %13 = vsyncpa [#allocation3], 0
    %s14 = scalar_lea.sflag [#allocation3], 1
    %15 = vsyncpa %s14, 0
    %16 = vsyncpa [#allocation6], 0
    %s17 = scalar_lea.sflag [#allocation6], 1
    %18 = vsyncpa %s17, 0
    %19 = vsyncpa [#allocation4], 0
    %s20 = scalar_lea.sflag [#allocation4], 1
    %21 = vsyncpa %s20, 0
    %22 = vsyncpa [#allocation10], 0
    %s23 = scalar_lea.sflag [#allocation10], 1
    %24 = vsyncpa %s23, 0
    %25 = vsyncpa [#allocation13], 0
    %s26 = scalar_lea.sflag [#allocation13], 1
    %27 = vsyncpa %s26, 0
    loop: start=0, step=1, limit=6
    $region2: #{tpu_custom_call.1} parent=1 // loop_pre_header
      _
    $region3: #{tpu_custom_call.1} parent=1 // loop_header
      %s29 = sphi 0, %s33
      %p30 = scmp.ge.s32.totalorder %s29, 6
      %s36 = sphi 0, %s48
      %s37 = sphi 0, %s44
      %s38 = sphi 0, %s36
      %s39 = sphi 0, %s37
      %s40 = sphi 0, %s38
      %s41 = sphi 0, %s39
      %s51 = sphi 0, %s53
      %s54 = sphi 0, %s51
      %s55 = sphi 0, %s54
      %s71 = sphi 0, %s55
      %s77 = sphi 0, %s79
      %s80 = sphi 0, %s77
      %s81 = sphi 0, %s80
      %s97 = sphi 0, %s81
      %s103 = sphi 0, %s105
      %s106 = sphi 0, %s103
      %s107 = sphi 0, %s106
      %s123 = sphi 0, %s107
      %s127 = sphi 0, %s127
      %s129 = sphi 0, %s127
      %s130 = sphi 0, %s129
      %s144 = sphi 0, %s130
      %s152 = sphi 0, %s154
      %s155 = sphi 0, %s152
      %s156 = sphi 0, %s155
      %s172 = sphi 0, %s156
      %s178 = sphi 0, %s180
      %s181 = sphi 0, %s178
      %s182 = sphi 0, %s181
      %s198 = sphi 0, %s182
      %s206 = sphi 0, %s208
      %s209 = sphi 0, %s206
      %s210 = sphi 0, %s209
      %s226 = sphi 0, %s210
      %s232 = sphi 0, %s234
      %s235 = sphi 0, %s232
      %s236 = sphi 0, %s235
      %s252 = sphi 0, %s236
    $region4: #{tpu_custom_call.1} parent=1 // loop_header_branch
      %32 = sbr.rel (%p30) target = $region8
    $region5: #{tpu_custom_call.1} parent=1 // loop_body
      %s34 = ssub.s32 %s29, 1
      %s35 = ssub.s32 %s29, 2
      %s42 = sadd.s32 1, %s37
      %p43 = scmp.ge.s32.totalorder %s42, 2
      %s44 = scalar_select %p43, 0, %s42
      %s45 = sadd.s32 1, %s36
      %s46 = scalar_select %p43, %s45, %s36
      %p47 = scmp.ge.s32.totalorder %s46, 2
      %s48 = scalar_select %p47, 0, %s46
      %s49 = ssub.s32 %s36, %s48
      %p50 = scmp.eq.s32.totalorder %s49, 0
      %s52 = sadd.s32 %s51, 1
      %s53 = scalar_select %p50, %s51, %s52
      %p56 = pneg %p50
      %p57 = scmp.eq.s32.totalorder %s29, 3
      %p58 = por %p56, %p57
      %p59 = scmp.ne.s32.totalorder %s51, %s54
      %p60 = scmp.eq.s32.totalorder %s29, 0
      %p61 = por %p59, %p60
      %p62 = scmp.ne.s32.totalorder %s51, %s54
      %p63 = scmp.eq.s32.totalorder %s34, 3
      %p64 = por %p62, %p63
      %p65 = scmp.ne.s32.totalorder %s54, %s55
      %p66 = scmp.eq.s32.totalorder %s34, 0
      %p67 = por %p65, %p66
      %p68 = scmp.ne.s32.totalorder %s54, %s55
      %p69 = scmp.eq.s32.totalorder %s35, 3
      %p70 = por %p68, %p69
      %p72 = scmp.ne.s32.totalorder %s55, %s71
      %p73 = scmp.eq.s32.totalorder %s35, 0
      %p74 = por %p72, %p73
      %s75 = ssub.s32 %s37, %s44
      %p76 = scmp.eq.s32.totalorder %s75, 0
      %s78 = sadd.s32 %s77, 1
      %s79 = scalar_select %p76, %s77, %s78
      %p82 = pneg %p76
      %p83 = scmp.eq.s32.totalorder %s29, 3
      %p84 = por %p82, %p83
      %p85 = scmp.ne.s32.totalorder %s77, %s80
      %p86 = scmp.eq.s32.totalorder %s29, 0
      %p87 = por %p85, %p86
      %p88 = scmp.ne.s32.totalorder %s77, %s80
      %p89 = scmp.eq.s32.totalorder %s34, 3
      %p90 = por %p88, %p89
      %p91 = scmp.ne.s32.totalorder %s80, %s81
      %p92 = scmp.eq.s32.totalorder %s34, 0
      %p93 = por %p91, %p92
      %p94 = scmp.ne.s32.totalorder %s80, %s81
      %p95 = scmp.eq.s32.totalorder %s35, 3
      %p96 = por %p94, %p95
      %p98 = scmp.ne.s32.totalorder %s81, %s97
      %p99 = scmp.eq.s32.totalorder %s35, 0
      %p100 = por %p98, %p99
      %s101 = ssub.s32 %s37, %s44
      %p102 = scmp.eq.s32.totalorder %s101, 0
      %s104 = sadd.s32 %s103, 1
      %s105 = scalar_select %p102, %s103, %s104
      %p108 = pneg %p102
      %p109 = scmp.eq.s32.totalorder %s29, 3
      %p110 = por %p108, %p109
      %p111 = scmp.ne.s32.totalorder %s103, %s106
      %p112 = scmp.eq.s32.totalorder %s29, 0
      %p113 = por %p111, %p112
      %p114 = scmp.ne.s32.totalorder %s103, %s106
      %p115 = scmp.eq.s32.totalorder %s34, 3
      %p116 = por %p114, %p115
      %p117 = scmp.ne.s32.totalorder %s106, %s107
      %p118 = scmp.eq.s32.totalorder %s34, 0
      %p119 = por %p117, %p118
      %p120 = scmp.ne.s32.totalorder %s106, %s107
      %p121 = scmp.eq.s32.totalorder %s35, 3
      %p122 = por %p120, %p121
      %p124 = scmp.ne.s32.totalorder %s107, %s123
      %p125 = scmp.eq.s32.totalorder %s35, 0
      %p126 = por %p124, %p125
      %s128 = sadd.s32 %s127, 1
      %p131 = scmp.eq.s32.totalorder %s29, 3
      %p132 = scmp.ne.s32.totalorder %s127, %s129
      %p133 = scmp.eq.s32.totalorder %s29, 0
      %p134 = por %p132, %p133
      %p135 = scmp.ne.s32.totalorder %s127, %s129
      %p136 = scmp.eq.s32.totalorder %s34, 3
      %p137 = por %p135, %p136
      %p138 = scmp.ne.s32.totalorder %s129, %s130
      %p139 = scmp.eq.s32.totalorder %s34, 0
      %p140 = por %p138, %p139
      %p141 = scmp.ne.s32.totalorder %s129, %s130
      %p142 = scmp.eq.s32.totalorder %s35, 3
      %p143 = por %p141, %p142
      %p145 = scmp.ne.s32.totalorder %s130, %s144
      %p146 = scmp.eq.s32.totalorder %s35, 0
      %p147 = por %p145, %p146
      %s148 = ssub.s32 %s36, %s48
      %s149 = ssub.s32 %s37, %s44
      %s150 = sor.u32 %s148, %s149
      %p151 = scmp.eq.s32.totalorder %s150, 0
      %s153 = sadd.s32 %s152, 1
      %s154 = scalar_select %p151, %s152, %s153
      %p157 = pneg %p151
      %p158 = scmp.eq.s32.totalorder %s29, 3
      %p159 = por %p157, %p158
      %p160 = scmp.ne.s32.totalorder %s152, %s155
      %p161 = scmp.eq.s32.totalorder %s29, 0
      %p162 = por %p160, %p161
      %p163 = scmp.ne.s32.totalorder %s152, %s155
      %p164 = scmp.eq.s32.totalorder %s34, 3
      %p165 = por %p163, %p164
      %p166 = scmp.ne.s32.totalorder %s155, %s156
      %p167 = scmp.eq.s32.totalorder %s34, 0
      %p168 = por %p166, %p167
      %p169 = scmp.ne.s32.totalorder %s155, %s156
      %p170 = scmp.eq.s32.totalorder %s35, 3
      %p171 = por %p169, %p170
      %p173 = scmp.ne.s32.totalorder %s156, %s172
      %p174 = scmp.eq.s32.totalorder %s35, 0
      %p175 = por %p173, %p174
      %s176 = ssub.s32 %s36, %s48
      %p177 = scmp.eq.s32.totalorder %s176, 0
      %s179 = sadd.s32 %s178, 1
      %s180 = scalar_select %p177, %s178, %s179
      %p183 = pneg %p177
      %p184 = scmp.eq.s32.totalorder %s29, 3
      %p185 = por %p183, %p184
      %p186 = scmp.ne.s32.totalorder %s178, %s181
      %p187 = scmp.eq.s32.totalorder %s29, 0
      %p188 = por %p186, %p187
      %p189 = scmp.ne.s32.totalorder %s178, %s181
      %p190 = scmp.eq.s32.totalorder %s34, 3
      %p191 = por %p189, %p190
      %p192 = scmp.ne.s32.totalorder %s181, %s182
      %p193 = scmp.eq.s32.totalorder %s34, 0
      %p194 = por %p192, %p193
      %p195 = scmp.ne.s32.totalorder %s181, %s182
      %p196 = scmp.eq.s32.totalorder %s35, 3
      %p197 = por %p195, %p196
      %p199 = scmp.ne.s32.totalorder %s182, %s198
      %p200 = scmp.eq.s32.totalorder %s35, 0
      %p201 = por %p199, %p200
      %s202 = ssub.s32 %s36, %s48
      %s203 = ssub.s32 %s37, %s44
      %s204 = sor.u32 %s202, %s203
      %p205 = scmp.eq.s32.totalorder %s204, 0
      %s207 = sadd.s32 %s206, 1
      %s208 = scalar_select %p205, %s206, %s207
      %p211 = pneg %p205
      %p212 = scmp.eq.s32.totalorder %s29, 3
      %p213 = por %p211, %p212
      %p214 = scmp.ne.s32.totalorder %s206, %s209
      %p215 = scmp.eq.s32.totalorder %s29, 0
      %p216 = por %p214, %p215
      %p217 = scmp.ne.s32.totalorder %s206, %s209
      %p218 = scmp.eq.s32.totalorder %s34, 3
      %p219 = por %p217, %p218
      %p220 = scmp.ne.s32.totalorder %s209, %s210
      %p221 = scmp.eq.s32.totalorder %s34, 0
      %p222 = por %p220, %p221
      %p223 = scmp.ne.s32.totalorder %s209, %s210
      %p224 = scmp.eq.s32.totalorder %s35, 3
      %p225 = por %p223, %p224
      %p227 = scmp.ne.s32.totalorder %s210, %s226
      %p228 = scmp.eq.s32.totalorder %s35, 0
      %p229 = por %p227, %p228
      %s230 = ssub.s32 %s36, %s48
      %p231 = scmp.eq.s32.totalorder %s230, 0
      %s233 = sadd.s32 %s232, 1
      %s234 = scalar_select %p231, %s232, %s233
      %p237 = pneg %p231
      %p238 = scmp.eq.s32.totalorder %s29, 3
      %p239 = por %p237, %p238
      %p240 = scmp.ne.s32.totalorder %s232, %s235
      %p241 = scmp.eq.s32.totalorder %s29, 0
      %p242 = por %p240, %p241
      %p243 = scmp.ne.s32.totalorder %s232, %s235
      %p244 = scmp.eq.s32.totalorder %s34, 3
      %p245 = por %p243, %p244
      %p246 = scmp.ne.s32.totalorder %s235, %s236
      %p247 = scmp.eq.s32.totalorder %s34, 0
      %p248 = por %p246, %p247
      %p249 = scmp.ne.s32.totalorder %s235, %s236
      %p250 = scmp.eq.s32.totalorder %s35, 3
      %p251 = por %p249, %p250
      %p253 = scmp.ne.s32.totalorder %s236, %s252
      %p254 = scmp.eq.s32.totalorder %s35, 0
      %p255 = por %p253, %p254
      %p256 = scmp.le.s32.totalorder 1, %s29
      %p257 = scmp.lt.s32.totalorder %s29, 5
      %p258 = pnand %p256, %p257
      %p259 = pneg %p258
      // Predicated region
      $region9: #{tpu_custom_call.1} parent=5 // pred_check
        _
      $region10: #{tpu_custom_call.1} parent=5 // pred_check_branch
        %261 = sbr.rel (%p258) target = $region12
      $region11: #{tpu_custom_call.1} parent=5 // pred_region
        %s262 = ssub.s32 %s29, 1
        // Predicated region
        $region13: #{tpu_custom_call.1} parent=11 // pred_check
          %p263 = pneg %p140
        $region14: #{tpu_custom_call.1} parent=11 // pred_check_branch
          %265 = sbr.rel (%p263) target = $region16
        $region15: #{tpu_custom_call.1} parent=11 // pred_region
          _
        $region16: #{tpu_custom_call.1} parent=11 // pred_fallthru
          _
      $region12: #{tpu_custom_call.1} parent=5 // pred_fallthru
        _
      %p266 = scmp.lt.s32.totalorder %s29, 4
      // Predicated region
      $region17: #{tpu_custom_call.1} parent=5 // pred_check
        %p267 = pneg %p266
      $region18: #{tpu_custom_call.1} parent=5 // pred_check_branch
        %269 = sbr.rel (%p267) target = $region20
      $region19: #{tpu_custom_call.1} parent=5 // pred_region
        // Predicated region
        $region21: #{tpu_custom_call.1} parent=19 // pred_check
          %p270 = pneg %p61
        $region22: #{tpu_custom_call.1} parent=19 // pred_check_branch
          %272 = sbr.rel (%p270) target = $region24
        $region23: #{tpu_custom_call.1} parent=19 // pred_region
          %s273 = sand.u32 %s51, 1
          %s274 = scalar_lea.sflag [#allocation3], %s273
          %s275 = sand.u32 %s51, 1
          %s276 = smul.addr %s275, 128
          %s277 = scalar_lea.vmem [#allocation2], %s276
          %s278 = smul.u32 16, %s36
          %s280 = ssub.s32 2048, 2048
          %281 = vsyncadd %s274, %s280
          %s282 = smul.addr %s278, 128
          %s283 = scalar_lea.hbm %s0, %s282
          %s284 = sshll.u32 %s277, 4
          %s285 = int_to_ptr.vmem [resolvable:$true] %s284
          %290 = dma.hbm_to_vmem [thread:$0]  %s283, 2048, %s285, %s274, 128, 128, 8
        $region24: #{tpu_custom_call.1} parent=19 // pred_fallthru
          _
        // Predicated region
        $region25: #{tpu_custom_call.1} parent=19 // pred_check
          %p291 = pneg %p87
        $region26: #{tpu_custom_call.1} parent=19 // pred_check_branch
          %293 = sbr.rel (%p291) target = $region28
        $region27: #{tpu_custom_call.1} parent=19 // pred_region
          %s294 = sand.u32 %s29, 1
          %s295 = scalar_lea.sflag [#allocation6], %s294
          %s296 = sand.u32 %s77, 1
          %s297 = smul.addr %s296, 128
          %s298 = scalar_lea.vmem [#allocation5], %s297
          %s299 = smul.u32 32, %s37
          %s301 = ssub.s32 2048, 2048
          %302 = vsyncadd %s295, %s301
          %s303 = smul.addr %s299, 64
          %s304 = scalar_lea.hbm %s1, %s303
          %s305 = sshll.u32 %s298, 4
          %s306 = int_to_ptr.vmem [resolvable:$true] %s305
          %311 = dma.hbm_to_vmem [thread:$0]  %s304, 2048, %s306, %s295, 64, 64, 4
        $region28: #{tpu_custom_call.1} parent=19 // pred_fallthru
          _
        // Predicated region
        $region29: #{tpu_custom_call.1} parent=19 // pred_check
          %p312 = pneg %p113
        $region30: #{tpu_custom_call.1} parent=19 // pred_check_branch
          %314 = sbr.rel (%p312) target = $region32
        $region31: #{tpu_custom_call.1} parent=19 // pred_region
          %s315 = sand.u32 %s29, 1
          %s316 = scalar_lea.sflag [#allocation6], %s315
          %s317 = sand.u32 %s103, 1
          %s318 = smul.addr %s317, 128
          %s319 = scalar_lea.vmem [#allocation7], %s318
          %s320 = smul.u32 2, %s37
          %s322 = ssub.s32 2048, 2048
          %323 = vsyncadd %s316, %s322
          %s324 = smul.addr %s320, 64
          %s325 = scalar_lea.hbm %s2, %s324
          %s326 = sshll.u32 %s319, 4
          %s327 = int_to_ptr.vmem [resolvable:$true] %s326
          %332 = dma.hbm_to_vmem [thread:$0]  %s325, 2048, %s327, %s316, 256, 128, 8
        $region32: #{tpu_custom_call.1} parent=19 // pred_fallthru
          _
      $region20: #{tpu_custom_call.1} parent=5 // pred_fallthru
        _
      %p333 = scmp.le.s32.totalorder 1, %s29
      %p334 = scmp.lt.s32.totalorder %s29, 5
      %p335 = pnand %p333, %p334
      %p336 = pneg %p335
      // Predicated region
      $region33: #{tpu_custom_call.1} parent=5 // pred_check
        _
      $region34: #{tpu_custom_call.1} parent=5 // pred_check_branch
        %338 = sbr.rel (%p335) target = $region36
      $region35: #{tpu_custom_call.1} parent=5 // pred_region
        %s339 = ssub.s32 %s29, 1
        %s340 = sand.u32 %s54, 1
        %s341 = scalar_lea.sflag [#allocation3], %s340
        %s342 = sand.u32 %s54, 1
        %s343 = smul.addr %s342, 128
        %s344 = scalar_lea.vmem [#allocation2], %s343
        // Predicated region
        $region37: #{tpu_custom_call.1} parent=35 // pred_check
          %p345 = pneg %p67
        $region38: #{tpu_custom_call.1} parent=35 // pred_check_branch
          %347 = sbr.rel (%p345) target = $region40
        $region39: #{tpu_custom_call.1} parent=35 // pred_region
          %348 = dma.done %s341, 2048
        $region40: #{tpu_custom_call.1} parent=35 // pred_fallthru
          _
        %s349 = sand.u32 %s34, 1
        %s350 = scalar_lea.sflag [#allocation6], %s349
        %s351 = sand.u32 %s80, 1
        %s352 = smul.addr %s351, 128
        %s353 = scalar_lea.vmem [#allocation5], %s352
        // Predicated region
        $region41: #{tpu_custom_call.1} parent=35 // pred_check
          %p354 = pneg %p93
        $region42: #{tpu_custom_call.1} parent=35 // pred_check_branch
          %356 = sbr.rel (%p354) target = $region44
        $region43: #{tpu_custom_call.1} parent=35 // pred_region
          %357 = dma.done %s350, 2048
        $region44: #{tpu_custom_call.1} parent=35 // pred_fallthru
          _
        %s358 = sand.u32 %s34, 1
        %s359 = scalar_lea.sflag [#allocation6], %s358
        %s360 = sand.u32 %s106, 1
        %s361 = smul.addr %s360, 128
        %s362 = scalar_lea.vmem [#allocation7], %s361
        // Predicated region
        $region45: #{tpu_custom_call.1} parent=35 // pred_check
          %p363 = pneg %p119
        $region46: #{tpu_custom_call.1} parent=35 // pred_check_branch
          %365 = sbr.rel (%p363) target = $region48
        $region47: #{tpu_custom_call.1} parent=35 // pred_region
          %366 = dma.done %s359, 2048
        $region48: #{tpu_custom_call.1} parent=35 // pred_fallthru
          _
        %s367 = sand.u32 %s54, 1
        %s368 = scalar_lea.sflag [#allocation3], %s367
        %s369 = sand.u32 %s54, 1
        %s370 = smul.addr %s369, 128
        %s371 = scalar_lea.vmem [#allocation2], %s370
        %p372 = pneg %p67
        %p373 = pneg %p64
        %s374 = sand.u32 %s34, 1
        %s375 = scalar_lea.sflag [#allocation6], %s374
        %s376 = sand.u32 %s80, 1
        %s377 = smul.addr %s376, 128
        %s378 = scalar_lea.vmem [#allocation5], %s377
        %p379 = pneg %p93
        %p380 = pneg %p90
        %s381 = sand.u32 %s34, 1
        %s382 = scalar_lea.sflag [#allocation6], %s381
        %s383 = sand.u32 %s106, 1
        %s384 = smul.addr %s383, 128
        %s385 = scalar_lea.vmem [#allocation7], %s384
        %p386 = pneg %p119
        %p387 = pneg %p116
        %p388 = pneg %p140
        %p389 = pneg %p137
        %p390 = pneg %p168
        %p391 = pneg %p165
        %s392 = sand.u32 %s155, 1
        %s393 = scalar_lea.sflag [#allocation4], %s392
        %s394 = sand.u32 %s155, 1
        %s395 = smul.addr %s394, 256
        %s396 = scalar_lea.vmem [#allocation8], %s395
        %p397 = pneg %p194
        %p398 = pneg %p191
        %s399 = sand.u32 %s34, 1
        %s400 = scalar_lea.sflag [#allocation10], %s399
        %s401 = sand.u32 %s181, 1
        %s402 = smul.addr %s401, 128
        %s403 = scalar_lea.vmem [#allocation9], %s402
        %p404 = pneg %p222
        %p405 = pneg %p219
        %s406 = sand.u32 %s34, 1
        %s407 = scalar_lea.sflag [#allocation10], %s406
        %s408 = sand.u32 %s209, 1
        %s409 = smul.addr %s408, 2
        %s410 = scalar_lea.vmem [#allocation11], %s409
        %p411 = pneg %p248
        %p412 = pneg %p245
        %s413 = sand.u32 %s235, 1
        %s414 = scalar_lea.sflag [#allocation13], %s413
        %s415 = sand.u32 %s235, 1
        %s416 = scalar_lea.vmem [#allocation12], %s415
        %s417 = smul.u32 16, %s38
        %s418 = smul.u32 32, %s39
        %s419 = smul.u32 2, %s39
        %s420 = smul.u32 16, %s38
        %s421 = smul.u32 2, %s39
        %s422 = smul.u32 16, %s38
        %s423 = smul.u32 2, %s39
        %v425 = vld [vmem:[%s344] sm:$0xff]
        %v426 = vld [vmem:[%s344 + $0x8] sm:$0xff]
        %v427 = vld [vmem:[%s344 + $0x10] sm:$0xff]
        %v428 = vld [vmem:[%s344 + $0x18] sm:$0xff]
        %v429 = vld [vmem:[%s344 + $0x20] sm:$0xff]
        %v430 = vld [vmem:[%s344 + $0x28] sm:$0xff]
        %v431 = vld [vmem:[%s344 + $0x30] sm:$0xff]
        %v432 = vld [vmem:[%s344 + $0x38] sm:$0xff]
        %v433 = vld [vmem:[%s344 + $0x40] sm:$0xff]
        %v434 = vld [vmem:[%s344 + $0x48] sm:$0xff]
        %v435 = vld [vmem:[%s344 + $0x50] sm:$0xff]
        %v436 = vld [vmem:[%s344 + $0x58] sm:$0xff]
        %v437 = vld [vmem:[%s344 + $0x60] sm:$0xff]
        %v438 = vld [vmem:[%s344 + $0x68] sm:$0xff]
        %v439 = vld [vmem:[%s344 + $0x70] sm:$0xff]
        %v440 = vld [vmem:[%s344 + $0x78] sm:$0xff]
        %v441 = vpack.c.bf16 %v426, %v425
        %v442 = vpack.c.bf16 %v428, %v427
        %v443 = vpack.c.bf16 %v430, %v429
        %v444 = vpack.c.bf16 %v432, %v431
        %v445 = vpack.c.bf16 %v434, %v433
        %v446 = vpack.c.bf16 %v436, %v435
        %v447 = vpack.c.bf16 %v438, %v437
        %v448 = vpack.c.bf16 %v440, %v439
        %v449 = vld [vmem:[%s353] sm:$0xf]
        %v450 = vld [vmem:[%s353 + $0x4] sm:$0xf]
        %v451 = vld [vmem:[%s353 + $0x8] sm:$0xf]
        %v452 = vld [vmem:[%s353 + $0xc] sm:$0xf]
        %v453 = vld [vmem:[%s353 + $0x10] sm:$0xf]
        %v454 = vld [vmem:[%s353 + $0x14] sm:$0xf]
        %v455 = vld [vmem:[%s353 + $0x18] sm:$0xf]
        %v456 = vld [vmem:[%s353 + $0x1c] sm:$0xf]
        %v457 = vld [vmem:[%s353 + $0x20] sm:$0xf]
        %v458 = vld [vmem:[%s353 + $0x24] sm:$0xf]
        %v459 = vld [vmem:[%s353 + $0x28] sm:$0xf]
        %v460 = vld [vmem:[%s353 + $0x2c] sm:$0xf]
        %v461 = vld [vmem:[%s353 + $0x30] sm:$0xf]
        %v462 = vld [vmem:[%s353 + $0x34] sm:$0xf]
        %v463 = vld [vmem:[%s353 + $0x38] sm:$0xf]
        %v464 = vld [vmem:[%s353 + $0x3c] sm:$0xf]
        %v465 = vld [vmem:[%s353 + $0x40] sm:$0xf]
        %v466 = vld [vmem:[%s353 + $0x44] sm:$0xf]
        %v467 = vld [vmem:[%s353 + $0x48] sm:$0xf]
        %v468 = vld [vmem:[%s353 + $0x4c] sm:$0xf]
        %v469 = vld [vmem:[%s353 + $0x50] sm:$0xf]
        %v470 = vld [vmem:[%s353 + $0x54] sm:$0xf]
        %v471 = vld [vmem:[%s353 + $0x58] sm:$0xf]
        %v472 = vld [vmem:[%s353 + $0x5c] sm:$0xf]
        %v473 = vld [vmem:[%s353 + $0x60] sm:$0xf]
        %v474 = vld [vmem:[%s353 + $0x64] sm:$0xf]
        %v475 = vld [vmem:[%s353 + $0x68] sm:$0xf]
        %v476 = vld [vmem:[%s353 + $0x6c] sm:$0xf]
        %v477 = vld [vmem:[%s353 + $0x70] sm:$0xf]
        %v478 = vld [vmem:[%s353 + $0x74] sm:$0xf]
        %v479 = vld [vmem:[%s353 + $0x78] sm:$0xf]
        %v480 = vld [vmem:[%s353 + $0x7c] sm:$0xf]
        %v513 = vunpack.c.l.b16 %v449
        %v514 = vunpack.c.l.b16 %v450
        %v515 = vunpack.c.l.b16 %v451
        %v516 = vunpack.c.l.b16 %v452
        %v517 = vunpack.c.l.b16 %v453
        %v518 = vunpack.c.l.b16 %v454
        %v519 = vunpack.c.l.b16 %v455
        %v520 = vunpack.c.l.b16 %v456
        %v521 = vunpack.c.l.b16 %v457
        %v522 = vunpack.c.l.b16 %v458
        %v523 = vunpack.c.l.b16 %v459
        %v524 = vunpack.c.l.b16 %v460
        %v525 = vunpack.c.l.b16 %v461
        %v526 = vunpack.c.l.b16 %v462
        %v527 = vunpack.c.l.b16 %v463
        %v528 = vunpack.c.l.b16 %v464
        %v529 = vunpack.c.l.b16 %v465
        %v530 = vunpack.c.l.b16 %v466
        %v531 = vunpack.c.l.b16 %v467
        %v532 = vunpack.c.l.b16 %v468
        %v533 = vunpack.c.l.b16 %v469
        %v534 = vunpack.c.l.b16 %v470
        %v535 = vunpack.c.l.b16 %v471
        %v536 = vunpack.c.l.b16 %v472
        %v537 = vunpack.c.l.b16 %v473
        %v538 = vunpack.c.l.b16 %v474
        %v539 = vunpack.c.l.b16 %v475
        %v540 = vunpack.c.l.b16 %v476
        %v541 = vunpack.c.l.b16 %v477
        %v542 = vunpack.c.l.b16 %v478
        %v543 = vunpack.c.l.b16 %v479
        %v544 = vunpack.c.l.b16 %v480
        %v545 = vpack.c.b16 %v514, %v513
        %v546 = vpack.c.b16 %v516, %v515
        %v547 = vpack.c.b16 %v518, %v517
        %v548 = vpack.c.b16 %v520, %v519
        %v549 = vpack.c.b16 %v522, %v521
        %v550 = vpack.c.b16 %v524, %v523
        %v551 = vpack.c.b16 %v526, %v525
        %v552 = vpack.c.b16 %v528, %v527
        %v553 = vpack.c.b16 %v530, %v529
        %v554 = vpack.c.b16 %v532, %v531
        %v555 = vpack.c.b16 %v534, %v533
        %v556 = vpack.c.b16 %v536, %v535
        %v557 = vpack.c.b16 %v538, %v537
        %v558 = vpack.c.b16 %v540, %v539
        %v559 = vpack.c.b16 %v542, %v541
        %v560 = vpack.c.b16 %v544, %v543
        %577 = vmatprep.subr.bf16.mxu0 0
        %578 = vmatpush1.bf16.xpose.msra.mxu0 %v552
        %579 = vmatprep.subr.bf16.mxu0 0
        %580 = vmatpush1.bf16.xpose.msra.mxu0 %v551
        %581 = vmatprep.subr.bf16.mxu0 0
        %582 = vmatpush1.bf16.xpose.msra.mxu0 %v550
        %583 = vmatprep.subr.bf16.mxu0 0
        %584 = vmatpush1.bf16.xpose.msra.mxu0 %v549
        %585 = vmatprep.subr.bf16.mxu0 0
        %586 = vmatpush1.bf16.xpose.msra.mxu0 %v548
        %587 = vmatprep.subr.bf16.mxu0 0
        %588 = vmatpush1.bf16.xpose.msra.mxu0 %v547
        %589 = vmatprep.subr.bf16.mxu0 0
        %590 = vmatpush1.bf16.xpose.msra.mxu0 %v546
        %591 = vmatprep.subr.bf16.mxu0 0
        %592 = vmatpush1.bf16.xpose.msra.mxu0 %v545
        %593 = vmatprep.subr.bf16.mxu0 0
        %594 = vmatpush2.bf16.xpose.msra.mxu0 %v560
        %595 = vmatprep.subr.bf16.mxu0 0
        %596 = vmatpush2.bf16.xpose.msra.mxu0 %v559
        %597 = vmatprep.subr.bf16.mxu0 0
        %598 = vmatpush2.bf16.xpose.msra.mxu0 %v558
        %599 = vmatprep.subr.bf16.mxu0 0
        %600 = vmatpush2.bf16.xpose.msra.mxu0 %v557
        %601 = vmatprep.subr.bf16.mxu0 0
        %602 = vmatpush2.bf16.xpose.msra.mxu0 %v556
        %603 = vmatprep.subr.bf16.mxu0 0
        %604 = vmatpush2.bf16.xpose.msra.mxu0 %v555
        %605 = vmatprep.subr.bf16.mxu0 0
        %606 = vmatpush2.bf16.xpose.msra.mxu0 %v554
        %607 = vmatprep.subr.bf16.mxu0 0
        %608 = vmatpush2.bf16.xpose.msra.mxu0 %v553
        %609 = vmatprep.mubr.bf16.mxu0 0
        %610 = vmatmul.mubr.bf16.gmra.mxu0 %v441
        %v611 = vpop.f32.mrf.mxu0
        %v612 = vadd.f32 0.0, %v611
        %v613 = vpop.f32.mrf.mxu0
        %v614 = vadd.f32 0.0, %v613
        %v615 = vpop.f32.mrf.mxu0
        %v616 = vadd.f32 0.0, %v615
        %v617 = vpop.f32.mrf.mxu0
        %v618 = vadd.f32 0.0, %v617
        %619 = vmatprep.mubr.bf16.mxu0 0
        %620 = vmatmul.mubr.bf16.gmra.mxu0 %v442
        %v621 = vpop.f32.mrf.mxu0
        %v622 = vadd.f32 0.0, %v621
        %v623 = vpop.f32.mrf.mxu0
        %v624 = vadd.f32 0.0, %v623
        %v625 = vpop.f32.mrf.mxu0
        %v626 = vadd.f32 0.0, %v625
        %v627 = vpop.f32.mrf.mxu0
        %v628 = vadd.f32 0.0, %v627
        %629 = vmatprep.mubr.bf16.mxu0 0
        %630 = vmatmul.mubr.bf16.gmra.mxu0 %v443
        %v631 = vpop.f32.mrf.mxu0
        %v632 = vadd.f32 0.0, %v631
        %v633 = vpop.f32.mrf.mxu0
        %v634 = vadd.f32 0.0, %v633
        %v635 = vpop.f32.mrf.mxu0
        %v636 = vadd.f32 0.0, %v635
        %v637 = vpop.f32.mrf.mxu0
        %v638 = vadd.f32 0.0, %v637
        %639 = vmatprep.mubr.bf16.mxu0 0
        %640 = vmatmul.mubr.bf16.gmra.mxu0 %v444
        %v641 = vpop.f32.mrf.mxu0
        %v642 = vadd.f32 0.0, %v641
        %v643 = vpop.f32.mrf.mxu0
        %v644 = vadd.f32 0.0, %v643
        %v645 = vpop.f32.mrf.mxu0
        %v646 = vadd.f32 0.0, %v645
        %v647 = vpop.f32.mrf.mxu0
        %v648 = vadd.f32 0.0, %v647
        %649 = vmatprep.mubr.bf16.mxu0 0
        %650 = vmatmul.mubr.bf16.gmra.mxu0 %v445
        %v651 = vpop.f32.mrf.mxu0
        %v652 = vadd.f32 0.0, %v651
        %v653 = vpop.f32.mrf.mxu0
        %v654 = vadd.f32 0.0, %v653
        %v655 = vpop.f32.mrf.mxu0
        %v656 = vadd.f32 0.0, %v655
        %v657 = vpop.f32.mrf.mxu0
        %v658 = vadd.f32 0.0, %v657
        %659 = vmatprep.mubr.bf16.mxu0 0
        %660 = vmatmul.mubr.bf16.gmra.mxu0 %v446
        %v661 = vpop.f32.mrf.mxu0
        %v662 = vadd.f32 0.0, %v661
        %v663 = vpop.f32.mrf.mxu0
        %v664 = vadd.f32 0.0, %v663
        %v665 = vpop.f32.mrf.mxu0
        %v666 = vadd.f32 0.0, %v665
        %v667 = vpop.f32.mrf.mxu0
        %v668 = vadd.f32 0.0, %v667
        %669 = vmatprep.mubr.bf16.mxu0 0
        %670 = vmatmul.mubr.bf16.gmra.mxu0 %v447
        %v671 = vpop.f32.mrf.mxu0
        %v672 = vadd.f32 0.0, %v671
        %v673 = vpop.f32.mrf.mxu0
        %v674 = vadd.f32 0.0, %v673
        %v675 = vpop.f32.mrf.mxu0
        %v676 = vadd.f32 0.0, %v675
        %v677 = vpop.f32.mrf.mxu0
        %v678 = vadd.f32 0.0, %v677
        %679 = vmatprep.mubr.bf16.mxu0 0
        %680 = vmatmul.mubr.bf16.gmra.mxu0 %v448
        %v681 = vpop.f32.mrf.mxu0
        %v682 = vadd.f32 0.0, %v681
        %v683 = vpop.f32.mrf.mxu0
        %v684 = vadd.f32 0.0, %v683
        %v685 = vpop.f32.mrf.mxu0
        %v686 = vadd.f32 0.0, %v685
        %v687 = vpop.f32.mrf.mxu0
        %v688 = vadd.f32 0.0, %v687
        %689 = vdwg.mxu0
        %v690 = vmax.f32 %v612, 0.0
        %v691 = vmax.f32 %v614, 0.0
        %v692 = vmax.f32 %v616, 0.0
        %v693 = vmax.f32 %v618, 0.0
        %v694 = vmax.f32 %v622, 0.0
        %v695 = vmax.f32 %v624, 0.0
        %v696 = vmax.f32 %v626, 0.0
        %v697 = vmax.f32 %v628, 0.0
        %v698 = vmax.f32 %v632, 0.0
        %v699 = vmax.f32 %v634, 0.0
        %v700 = vmax.f32 %v636, 0.0
        %v701 = vmax.f32 %v638, 0.0
        %v702 = vmax.f32 %v642, 0.0
        %v703 = vmax.f32 %v644, 0.0
        %v704 = vmax.f32 %v646, 0.0
        %v705 = vmax.f32 %v648, 0.0
        %v706 = vmax.f32 %v652, 0.0
        %v707 = vmax.f32 %v654, 0.0
        %v708 = vmax.f32 %v656, 0.0
        %v709 = vmax.f32 %v658, 0.0
        %v710 = vmax.f32 %v662, 0.0
        %v711 = vmax.f32 %v664, 0.0
        %v712 = vmax.f32 %v666, 0.0
        %v713 = vmax.f32 %v668, 0.0
        %v714 = vmax.f32 %v672, 0.0
        %v715 = vmax.f32 %v674, 0.0
        %v716 = vmax.f32 %v676, 0.0
        %v717 = vmax.f32 %v678, 0.0
        %v718 = vmax.f32 %v682, 0.0
        %v719 = vmax.f32 %v684, 0.0
        %v720 = vmax.f32 %v686, 0.0
        %v721 = vmax.f32 %v688, 0.0
        %722 = vst [vmem:[%s396] sm:$0xff] %v690
        %723 = vst [vmem:[%s396 + $0x8] sm:$0xff] %v691
        %724 = vst [vmem:[%s396 + $0x10] sm:$0xff] %v692
        %725 = vst [vmem:[%s396 + $0x18] sm:$0xff] %v693
        %726 = vst [vmem:[%s396 + $0x20] sm:$0xff] %v694
        %727 = vst [vmem:[%s396 + $0x28] sm:$0xff] %v695
        %728 = vst [vmem:[%s396 + $0x30] sm:$0xff] %v696
        %729 = vst [vmem:[%s396 + $0x38] sm:$0xff] %v697
        %730 = vst [vmem:[%s396 + $0x40] sm:$0xff] %v698
        %731 = vst [vmem:[%s396 + $0x48] sm:$0xff] %v699
        %732 = vst [vmem:[%s396 + $0x50] sm:$0xff] %v700
        %733 = vst [vmem:[%s396 + $0x58] sm:$0xff] %v701
        %734 = vst [vmem:[%s396 + $0x60] sm:$0xff] %v702
        %735 = vst [vmem:[%s396 + $0x68] sm:$0xff] %v703
        %736 = vst [vmem:[%s396 + $0x70] sm:$0xff] %v704
        %737 = vst [vmem:[%s396 + $0x78] sm:$0xff] %v705
        %738 = vst [vmem:[%s396 + $0x80] sm:$0xff] %v706
        %739 = vst [vmem:[%s396 + $0x88] sm:$0xff] %v707
        %740 = vst [vmem:[%s396 + $0x90] sm:$0xff] %v708
        %741 = vst [vmem:[%s396 + $0x98] sm:$0xff] %v709
        %742 = vst [vmem:[%s396 + $0xa0] sm:$0xff] %v710
        %743 = vst [vmem:[%s396 + $0xa8] sm:$0xff] %v711
        %744 = vst [vmem:[%s396 + $0xb0] sm:$0xff] %v712
        %745 = vst [vmem:[%s396 + $0xb8] sm:$0xff] %v713
        %746 = vst [vmem:[%s396 + $0xc0] sm:$0xff] %v714
        %747 = vst [vmem:[%s396 + $0xc8] sm:$0xff] %v715
        %748 = vst [vmem:[%s396 + $0xd0] sm:$0xff] %v716
        %749 = vst [vmem:[%s396 + $0xd8] sm:$0xff] %v717
        %750 = vst [vmem:[%s396 + $0xe0] sm:$0xff] %v718
        %751 = vst [vmem:[%s396 + $0xe8] sm:$0xff] %v719
        %752 = vst [vmem:[%s396 + $0xf0] sm:$0xff] %v720
        %753 = vst [vmem:[%s396 + $0xf8] sm:$0xff] %v721
        %v754 = vadd.f32 %v690, %v692
        %v755 = vadd.f32 %v754, %v694
        %v756 = vadd.f32 %v755, %v696
        %v757 = vadd.f32 %v756, %v698
        %v758 = vadd.f32 %v757, %v700
        %v759 = vadd.f32 %v758, %v702
        %v760 = vadd.f32 %v759, %v704
        %v761 = vadd.f32 %v760, %v706
        %v762 = vadd.f32 %v761, %v708
        %v763 = vadd.f32 %v762, %v710
        %v764 = vadd.f32 %v763, %v712
        %v765 = vadd.f32 %v764, %v714
        %v766 = vadd.f32 %v765, %v716
        %v767 = vadd.f32 %v766, %v718
        %v768 = vadd.f32 %v767, %v720
        %v769 = vrot.slane %v768, 4
        %v770 = vadd.f32 %v768, %v769
        %v771 = vrot.slane %v770, 2
        %v772 = vadd.f32 %v770, %v771
        %v773 = vrot.slane %v772, 1
        %v774 = vadd.f32 %v772, %v773
        %v775 = vadd.f32 %v691, %v693
        %v776 = vadd.f32 %v775, %v695
        %v777 = vadd.f32 %v776, %v697
        %v778 = vadd.f32 %v777, %v699
        %v779 = vadd.f32 %v778, %v701
        %v780 = vadd.f32 %v779, %v703
        %v781 = vadd.f32 %v780, %v705
        %v782 = vadd.f32 %v781, %v707
        %v783 = vadd.f32 %v782, %v709
        %v784 = vadd.f32 %v783, %v711
        %v785 = vadd.f32 %v784, %v713
        %v786 = vadd.f32 %v785, %v715
        %v787 = vadd.f32 %v786, %v717
        %v788 = vadd.f32 %v787, %v719
        %v789 = vadd.f32 %v788, %v721
        %v790 = vrot.slane %v789, 4
        %v791 = vadd.f32 %v789, %v790
        %v792 = vrot.slane %v791, 2
        %v793 = vadd.f32 %v791, %v792
        %v794 = vrot.slane %v793, 1
        %v795 = vadd.f32 %v793, %v794
        %v798 = vcombine.low %v774, %v795
        %v800 = vunpack.c.l.s4 1966171168
        %v801 = vunpack.c.0.s8 %v800
        %v802 = vlaneseq
        %v803 = vshrl.u32 %v802, 7
        %v804 = vsub.s32 %v801, %v803
        %v805 = vrot.slane %v798, %v804
        %v807 = vunpack.c.l.s4 1966171168
        %v808 = vunpack.c.0.s8 %v807
        %v809 = vlaneseq
        %v810 = vshrl.u32 %v809, 7
        %v811 = vsub.s32 %v808, %v810
        %v812 = vrot.slane %v805, %v811
        %v814 = vlaneseq
        %vm815 = vcmp.ge.s32.totalorder %v814, 0
        %vm816 = vcmp.lt.s32.totalorder %v814, 256
        %vm817 = vmand %vm815, %vm816
        %818 = vst.msk [vmem:[%s410] sm:$0x3] %vm817, %v812
        %v819 = vpack.c.bf16 %v692, %v690
        %v820 = vpack.c.bf16 %v693, %v691
        %v821 = vpack.c.bf16 %v696, %v694
        %v822 = vpack.c.bf16 %v697, %v695
        %v823 = vpack.c.bf16 %v700, %v698
        %v824 = vpack.c.bf16 %v701, %v699
        %v825 = vpack.c.bf16 %v704, %v702
        %v826 = vpack.c.bf16 %v705, %v703
        %v827 = vpack.c.bf16 %v708, %v706
        %v828 = vpack.c.bf16 %v709, %v707
        %v829 = vpack.c.bf16 %v712, %v710
        %v830 = vpack.c.bf16 %v713, %v711
        %v831 = vpack.c.bf16 %v716, %v714
        %v832 = vpack.c.bf16 %v717, %v715
        %v833 = vpack.c.bf16 %v720, %v718
        %v834 = vpack.c.bf16 %v721, %v719
        %v835 = vld [vmem:[%s362] sm:$0xff]
        %v836 = vld [vmem:[%s362 + $0x8] sm:$0xff]
        %v837 = vld [vmem:[%s362 + $0x10] sm:$0xff]
        %v838 = vld [vmem:[%s362 + $0x18] sm:$0xff]
        %v839 = vld [vmem:[%s362 + $0x20] sm:$0xff]
        %v840 = vld [vmem:[%s362 + $0x28] sm:$0xff]
        %v841 = vld [vmem:[%s362 + $0x30] sm:$0xff]
        %v842 = vld [vmem:[%s362 + $0x38] sm:$0xff]
        %v843 = vld [vmem:[%s362 + $0x40] sm:$0xff]
        %v844 = vld [vmem:[%s362 + $0x48] sm:$0xff]
        %v845 = vld [vmem:[%s362 + $0x50] sm:$0xff]
        %v846 = vld [vmem:[%s362 + $0x58] sm:$0xff]
        %v847 = vld [vmem:[%s362 + $0x60] sm:$0xff]
        %v848 = vld [vmem:[%s362 + $0x68] sm:$0xff]
        %v849 = vld [vmem:[%s362 + $0x70] sm:$0xff]
        %v850 = vld [vmem:[%s362 + $0x78] sm:$0xff]
        %v867 = vunpack.c.l.b16 %v835
        %v868 = vunpack.c.h.b16 %v835
        %v869 = vunpack.c.l.b16 %v836
        %v870 = vunpack.c.h.b16 %v836
        %v871 = vunpack.c.l.b16 %v837
        %v872 = vunpack.c.h.b16 %v837
        %v873 = vunpack.c.l.b16 %v838
        %v874 = vunpack.c.h.b16 %v838
        %v875 = vunpack.c.l.b16 %v839
        %v876 = vunpack.c.h.b16 %v839
        %v877 = vunpack.c.l.b16 %v840
        %v878 = vunpack.c.h.b16 %v840
        %v879 = vunpack.c.l.b16 %v841
        %v880 = vunpack.c.h.b16 %v841
        %v881 = vunpack.c.l.b16 %v842
        %v882 = vunpack.c.h.b16 %v842
        %v883 = vunpack.c.l.b16 %v843
        %v884 = vunpack.c.h.b16 %v843
        %v885 = vunpack.c.l.b16 %v844
        %v886 = vunpack.c.h.b16 %v844
        %v887 = vunpack.c.l.b16 %v845
        %v888 = vunpack.c.h.b16 %v845
        %v889 = vunpack.c.l.b16 %v846
        %v890 = vunpack.c.h.b16 %v846
        %v891 = vunpack.c.l.b16 %v847
        %v892 = vunpack.c.h.b16 %v847
        %v893 = vunpack.c.l.b16 %v848
        %v894 = vunpack.c.h.b16 %v848
        %v895 = vunpack.c.l.b16 %v849
        %v896 = vunpack.c.h.b16 %v849
        %v897 = vunpack.c.l.b16 %v850
        %v898 = vunpack.c.h.b16 %v850
        %v899 = vpack.c.b16 %v869, %v867
        %v900 = vpack.c.b16 %v870, %v868
        %v901 = vpack.c.b16 %v873, %v871
        %v902 = vpack.c.b16 %v874, %v872
        %v903 = vpack.c.b16 %v877, %v875
        %v904 = vpack.c.b16 %v878, %v876
        %v905 = vpack.c.b16 %v881, %v879
        %v906 = vpack.c.b16 %v882, %v880
        %v907 = vpack.c.b16 %v885, %v883
        %v908 = vpack.c.b16 %v886, %v884
        %v909 = vpack.c.b16 %v889, %v887
        %v910 = vpack.c.b16 %v890, %v888
        %v911 = vpack.c.b16 %v893, %v891
        %v912 = vpack.c.b16 %v894, %v892
        %v913 = vpack.c.b16 %v897, %v895
        %v914 = vpack.c.b16 %v898, %v896
        %931 = vmatprep.subr.bf16.mxu0 %v914
        %932 = vmatpush1.bf16.xpose.msra.mxu0 %v913
        %933 = vmatprep.subr.bf16.mxu0 %v912
        %934 = vmatpush1.bf16.xpose.msra.mxu0 %v911
        %935 = vmatprep.subr.bf16.mxu0 %v910
        %936 = vmatpush1.bf16.xpose.msra.mxu0 %v909
        %937 = vmatprep.subr.bf16.mxu0 %v908
        %938 = vmatpush1.bf16.xpose.msra.mxu0 %v907
        %939 = vmatprep.subr.bf16.mxu0 %v906
        %940 = vmatpush1.bf16.xpose.msra.mxu0 %v905
        %941 = vmatprep.subr.bf16.mxu0 %v904
        %942 = vmatpush1.bf16.xpose.msra.mxu0 %v903
        %943 = vmatprep.subr.bf16.mxu0 %v902
        %944 = vmatpush1.bf16.xpose.msra.mxu0 %v901
        %945 = vmatprep.subr.bf16.mxu0 %v900
        %946 = vmatpush1.bf16.xpose.msra.mxu0 %v899
        %947 = vmatprep.subr.bf16.mxu0 0
        %948 = vmatpush2.bf16.xpose.msra.mxu0 0
        %949 = vmatprep.subr.bf16.mxu0 0
        %950 = vmatpush2.bf16.xpose.msra.mxu0 0
        %951 = vmatprep.subr.bf16.mxu0 0
        %952 = vmatpush2.bf16.xpose.msra.mxu0 0
        %953 = vmatprep.subr.bf16.mxu0 0
        %954 = vmatpush2.bf16.xpose.msra.mxu0 0
        %955 = vmatprep.subr.bf16.mxu0 0
        %956 = vmatpush2.bf16.xpose.msra.mxu0 0
        %957 = vmatprep.subr.bf16.mxu0 0
        %958 = vmatpush2.bf16.xpose.msra.mxu0 0
        %959 = vmatprep.subr.bf16.mxu0 0
        %960 = vmatpush2.bf16.xpose.msra.mxu0 0
        %961 = vmatprep.subr.bf16.mxu0 0
        %962 = vmatpush2.bf16.xpose.msra.mxu0 0
        %963 = vmatprep.mubr.bf16.mxu0 %v820
        %964 = vmatmul.mubr.bf16.gmra.mxu0 %v819
        %v965 = vpop.f32.mrf.mxu0
        %v966 = vadd.f32 0.0, %v965
        %v967 = vpop.f32.mrf.mxu0
        %v968 = vpop.f32.mrf.mxu0
        %v969 = vadd.f32 0.0, %v968
        %v970 = vpop.f32.mrf.mxu0
        %971 = vmatprep.mubr.bf16.mxu0 %v822
        %972 = vmatmul.mubr.bf16.gmra.mxu0 %v821
        %v973 = vpop.f32.mrf.mxu0
        %v974 = vadd.f32 0.0, %v973
        %v975 = vpop.f32.mrf.mxu0
        %v976 = vpop.f32.mrf.mxu0
        %v977 = vadd.f32 0.0, %v976
        %v978 = vpop.f32.mrf.mxu0
        %979 = vmatprep.mubr.bf16.mxu0 %v824
        %980 = vmatmul.mubr.bf16.gmra.mxu0 %v823
        %v981 = vpop.f32.mrf.mxu0
        %v982 = vadd.f32 0.0, %v981
        %v983 = vpop.f32.mrf.mxu0
        %v984 = vpop.f32.mrf.mxu0
        %v985 = vadd.f32 0.0, %v984
        %v986 = vpop.f32.mrf.mxu0
        %987 = vmatprep.mubr.bf16.mxu0 %v826
        %988 = vmatmul.mubr.bf16.gmra.mxu0 %v825
        %v989 = vpop.f32.mrf.mxu0
        %v990 = vadd.f32 0.0, %v989
        %v991 = vpop.f32.mrf.mxu0
        %v992 = vpop.f32.mrf.mxu0
        %v993 = vadd.f32 0.0, %v992
        %v994 = vpop.f32.mrf.mxu0
        %995 = vmatprep.mubr.bf16.mxu0 %v828
        %996 = vmatmul.mubr.bf16.gmra.mxu0 %v827
        %v997 = vpop.f32.mrf.mxu0
        %v998 = vadd.f32 0.0, %v997
        %v999 = vpop.f32.mrf.mxu0
        %v1000 = vpop.f32.mrf.mxu0
        %v1001 = vadd.f32 0.0, %v1000
        %v1002 = vpop.f32.mrf.mxu0
        %1003 = vmatprep.mubr.bf16.mxu0 %v830
        %1004 = vmatmul.mubr.bf16.gmra.mxu0 %v829
        %v1005 = vpop.f32.mrf.mxu0
        %v1006 = vadd.f32 0.0, %v1005
        %v1007 = vpop.f32.mrf.mxu0
        %v1008 = vpop.f32.mrf.mxu0
        %v1009 = vadd.f32 0.0, %v1008
        %v1010 = vpop.f32.mrf.mxu0
        %1011 = vmatprep.mubr.bf16.mxu0 %v832
        %1012 = vmatmul.mubr.bf16.gmra.mxu0 %v831
        %v1013 = vpop.f32.mrf.mxu0
        %v1014 = vadd.f32 0.0, %v1013
        %v1015 = vpop.f32.mrf.mxu0
        %v1016 = vpop.f32.mrf.mxu0
        %v1017 = vadd.f32 0.0, %v1016
        %v1018 = vpop.f32.mrf.mxu0
        %1019 = vmatprep.mubr.bf16.mxu0 %v834
        %1020 = vmatmul.mubr.bf16.gmra.mxu0 %v833
        %v1021 = vpop.f32.mrf.mxu0
        %v1022 = vadd.f32 0.0, %v1021
        %v1023 = vpop.f32.mrf.mxu0
        %v1024 = vpop.f32.mrf.mxu0
        %v1025 = vadd.f32 0.0, %v1024
        %v1026 = vpop.f32.mrf.mxu0
        %1027 = vdwg.mxu0
        %p1028 = scmp.eq.s32.totalorder %s39, 0
        // Predicated region
        $region49: #{tpu_custom_call.1} parent=35 // pred_check
          %p1029 = pneg %p1028
        $region50: #{tpu_custom_call.1} parent=35 // pred_check_branch
          %1031 = sbr.rel (%p1029) target = $region52
        $region51: #{tpu_custom_call.1} parent=35 // pred_region
          %v1032 = vld [vmem:[%s3] sm:$0x1]
          %v1034 = vlaneseq
          %v1035 = vshrl.u32 %v1034, 7
          %v1036 = vsub.s32 0, %v1035
          %v1037 = vrot.slane %v1032, %v1036
          %v1039 = vadd.f32 %v966, %v1037
          %v1040 = vadd.f32 %v969, %v1037
          %v1041 = vadd.f32 %v974, %v1037
          %v1042 = vadd.f32 %v977, %v1037
          %v1043 = vadd.f32 %v982, %v1037
          %v1044 = vadd.f32 %v985, %v1037
          %v1045 = vadd.f32 %v990, %v1037
          %v1046 = vadd.f32 %v993, %v1037
          %v1047 = vadd.f32 %v998, %v1037
          %v1048 = vadd.f32 %v1001, %v1037
          %v1049 = vadd.f32 %v1006, %v1037
          %v1050 = vadd.f32 %v1009, %v1037
          %v1051 = vadd.f32 %v1014, %v1037
          %v1052 = vadd.f32 %v1017, %v1037
          %v1053 = vadd.f32 %v1022, %v1037
          %v1054 = vadd.f32 %v1025, %v1037
          %1055 = vst [vmem:[%s403] sm:$0xff] %v1039
          %1056 = vst [vmem:[%s403 + $0x8] sm:$0xff] %v1040
          %1057 = vst [vmem:[%s403 + $0x10] sm:$0xff] %v1041
          %1058 = vst [vmem:[%s403 + $0x18] sm:$0xff] %v1042
          %1059 = vst [vmem:[%s403 + $0x20] sm:$0xff] %v1043
          %1060 = vst [vmem:[%s403 + $0x28] sm:$0xff] %v1044
          %1061 = vst [vmem:[%s403 + $0x30] sm:$0xff] %v1045
          %1062 = vst [vmem:[%s403 + $0x38] sm:$0xff] %v1046
          %1063 = vst [vmem:[%s403 + $0x40] sm:$0xff] %v1047
          %1064 = vst [vmem:[%s403 + $0x48] sm:$0xff] %v1048
          %1065 = vst [vmem:[%s403 + $0x50] sm:$0xff] %v1049
          %1066 = vst [vmem:[%s403 + $0x58] sm:$0xff] %v1050
          %1067 = vst [vmem:[%s403 + $0x60] sm:$0xff] %v1051
          %1068 = vst [vmem:[%s403 + $0x68] sm:$0xff] %v1052
          %1069 = vst [vmem:[%s403 + $0x70] sm:$0xff] %v1053
          %1070 = vst [vmem:[%s403 + $0x78] sm:$0xff] %v1054
        $region52: #{tpu_custom_call.1} parent=35 // pred_fallthru
          _
        %p1071 = scmp.gt.s32.totalorder %s39, 0
        // Predicated region
        $region53: #{tpu_custom_call.1} parent=35 // pred_check
          %p1072 = pneg %p1071
        $region54: #{tpu_custom_call.1} parent=35 // pred_check_branch
          %1074 = sbr.rel (%p1072) target = $region56
        $region55: #{tpu_custom_call.1} parent=35 // pred_region
          %v1075 = vld [vmem:[%s403] sm:$0xff]
          %v1076 = vld [vmem:[%s403 + $0x8] sm:$0xff]
          %v1077 = vld [vmem:[%s403 + $0x10] sm:$0xff]
          %v1078 = vld [vmem:[%s403 + $0x18] sm:$0xff]
          %v1079 = vld [vmem:[%s403 + $0x20] sm:$0xff]
          %v1080 = vld [vmem:[%s403 + $0x28] sm:$0xff]
          %v1081 = vld [vmem:[%s403 + $0x30] sm:$0xff]
          %v1082 = vld [vmem:[%s403 + $0x38] sm:$0xff]
          %v1083 = vld [vmem:[%s403 + $0x40] sm:$0xff]
          %v1084 = vld [vmem:[%s403 + $0x48] sm:$0xff]
          %v1085 = vld [vmem:[%s403 + $0x50] sm:$0xff]
          %v1086 = vld [vmem:[%s403 + $0x58] sm:$0xff]
          %v1087 = vld [vmem:[%s403 + $0x60] sm:$0xff]
          %v1088 = vld [vmem:[%s403 + $0x68] sm:$0xff]
          %v1089 = vld [vmem:[%s403 + $0x70] sm:$0xff]
          %v1090 = vld [vmem:[%s403 + $0x78] sm:$0xff]
          %v1091 = vadd.f32 %v1075, %v966
          %v1092 = vadd.f32 %v1076, %v969
          %v1093 = vadd.f32 %v1077, %v974
          %v1094 = vadd.f32 %v1078, %v977
          %v1095 = vadd.f32 %v1079, %v982
          %v1096 = vadd.f32 %v1080, %v985
          %v1097 = vadd.f32 %v1081, %v990
          %v1098 = vadd.f32 %v1082, %v993
          %v1099 = vadd.f32 %v1083, %v998
          %v1100 = vadd.f32 %v1084, %v1001
          %v1101 = vadd.f32 %v1085, %v1006
          %v1102 = vadd.f32 %v1086, %v1009
          %v1103 = vadd.f32 %v1087, %v1014
          %v1104 = vadd.f32 %v1088, %v1017
          %v1105 = vadd.f32 %v1089, %v1022
          %v1106 = vadd.f32 %v1090, %v1025
          %1107 = vst [vmem:[%s403] sm:$0xff] %v1091
          %1108 = vst [vmem:[%s403 + $0x8] sm:$0xff] %v1092
          %1109 = vst [vmem:[%s403 + $0x10] sm:$0xff] %v1093
          %1110 = vst [vmem:[%s403 + $0x18] sm:$0xff] %v1094
          %1111 = vst [vmem:[%s403 + $0x20] sm:$0xff] %v1095
          %1112 = vst [vmem:[%s403 + $0x28] sm:$0xff] %v1096
          %1113 = vst [vmem:[%s403 + $0x30] sm:$0xff] %v1097
          %1114 = vst [vmem:[%s403 + $0x38] sm:$0xff] %v1098
          %1115 = vst [vmem:[%s403 + $0x40] sm:$0xff] %v1099
          %1116 = vst [vmem:[%s403 + $0x48] sm:$0xff] %v1100
          %1117 = vst [vmem:[%s403 + $0x50] sm:$0xff] %v1101
          %1118 = vst [vmem:[%s403 + $0x58] sm:$0xff] %v1102
          %1119 = vst [vmem:[%s403 + $0x60] sm:$0xff] %v1103
          %1120 = vst [vmem:[%s403 + $0x68] sm:$0xff] %v1104
          %1121 = vst [vmem:[%s403 + $0x70] sm:$0xff] %v1105
          %1122 = vst [vmem:[%s403 + $0x78] sm:$0xff] %v1106
        $region56: #{tpu_custom_call.1} parent=35 // pred_fallthru
          _
        %p1123 = scmp.eq.s32.totalorder %s39, 1
        // Predicated region
        $region57: #{tpu_custom_call.1} parent=35 // pred_check
          %p1124 = pneg %p1123
        $region58: #{tpu_custom_call.1} parent=35 // pred_check_branch
          %1126 = sbr.rel (%p1124) target = $region60
        $region59: #{tpu_custom_call.1} parent=35 // pred_region
          %v1127 = vld [vmem:[%s403] sm:$0xff]
          %v1128 = vld [vmem:[%s403 + $0x8] sm:$0xff]
          %v1129 = vld [vmem:[%s403 + $0x10] sm:$0xff]
          %v1130 = vld [vmem:[%s403 + $0x18] sm:$0xff]
          %v1131 = vld [vmem:[%s403 + $0x20] sm:$0xff]
          %v1132 = vld [vmem:[%s403 + $0x28] sm:$0xff]
          %v1133 = vld [vmem:[%s403 + $0x30] sm:$0xff]
          %v1134 = vld [vmem:[%s403 + $0x38] sm:$0xff]
          %v1135 = vld [vmem:[%s403 + $0x40] sm:$0xff]
          %v1136 = vld [vmem:[%s403 + $0x48] sm:$0xff]
          %v1137 = vld [vmem:[%s403 + $0x50] sm:$0xff]
          %v1138 = vld [vmem:[%s403 + $0x58] sm:$0xff]
          %v1139 = vld [vmem:[%s403 + $0x60] sm:$0xff]
          %v1140 = vld [vmem:[%s403 + $0x68] sm:$0xff]
          %v1141 = vld [vmem:[%s403 + $0x70] sm:$0xff]
          %v1142 = vld [vmem:[%s403 + $0x78] sm:$0xff]
          %v1143 = vsub.f32 %v1127, %v425
          %v1144 = vsub.f32 %v1128, %v426
          %v1145 = vsub.f32 %v1129, %v427
          %v1146 = vsub.f32 %v1130, %v428
          %v1147 = vsub.f32 %v1131, %v429
          %v1148 = vsub.f32 %v1132, %v430
          %v1149 = vsub.f32 %v1133, %v431
          %v1150 = vsub.f32 %v1134, %v432
          %v1151 = vsub.f32 %v1135, %v433
          %v1152 = vsub.f32 %v1136, %v434
          %v1153 = vsub.f32 %v1137, %v435
          %v1154 = vsub.f32 %v1138, %v436
          %v1155 = vsub.f32 %v1139, %v437
          %v1156 = vsub.f32 %v1140, %v438
          %v1157 = vsub.f32 %v1141, %v439
          %v1158 = vsub.f32 %v1142, %v440
          %v1159 = vmul.f32 %v1143, %v1143
          %v1160 = vmul.f32 %v1144, %v1144
          %v1161 = vmul.f32 %v1145, %v1145
          %v1162 = vmul.f32 %v1146, %v1146
          %v1163 = vmul.f32 %v1147, %v1147
          %v1164 = vmul.f32 %v1148, %v1148
          %v1165 = vmul.f32 %v1149, %v1149
          %v1166 = vmul.f32 %v1150, %v1150
          %v1167 = vmul.f32 %v1151, %v1151
          %v1168 = vmul.f32 %v1152, %v1152
          %v1169 = vmul.f32 %v1153, %v1153
          %v1170 = vmul.f32 %v1154, %v1154
          %v1171 = vmul.f32 %v1155, %v1155
          %v1172 = vmul.f32 %v1156, %v1156
          %v1173 = vmul.f32 %v1157, %v1157
          %v1174 = vmul.f32 %v1158, %v1158
          %v1175 = vadd.f32 %v1159, %v1160
          %v1176 = vadd.f32 %v1175, %v1161
          %v1177 = vadd.f32 %v1176, %v1162
          %v1178 = vadd.f32 %v1177, %v1163
          %v1179 = vadd.f32 %v1178, %v1164
          %v1180 = vadd.f32 %v1179, %v1165
          %v1181 = vadd.f32 %v1180, %v1166
          %v1182 = vadd.f32 %v1181, %v1167
          %v1183 = vadd.f32 %v1182, %v1168
          %v1184 = vadd.f32 %v1183, %v1169
          %v1185 = vadd.f32 %v1184, %v1170
          %v1186 = vadd.f32 %v1185, %v1171
          %v1187 = vadd.f32 %v1186, %v1172
          %v1188 = vadd.f32 %v1187, %v1173
          %v1189 = vadd.f32 %v1188, %v1174
          %v1190 = vrot.slane %v1189, 4
          %v1191 = vadd.f32 %v1189, %v1190
          %v1192 = vrot.slane %v1191, 2
          %v1193 = vadd.f32 %v1191, %v1192
          %v1194 = vrot.slane %v1193, 1
          %v1195 = vadd.f32 %v1193, %v1194
          %1196 = vst [vmem:[%s416] sm:$0x1] %v1195
        $region60: #{tpu_custom_call.1} parent=35 // pred_fallthru
          _
        %s1197 = sand.u32 %s155, 1
        %s1198 = scalar_lea.sflag [#allocation4], %s1197
        %s1199 = sand.u32 %s155, 1
        %s1200 = smul.addr %s1199, 256
        %s1201 = scalar_lea.vmem [#allocation8], %s1200
        %s1202 = sand.u32 %s34, 1
        %s1203 = scalar_lea.sflag [#allocation10], %s1202
        %s1204 = sand.u32 %s181, 1
        %s1205 = smul.addr %s1204, 128
        %s1206 = scalar_lea.vmem [#allocation9], %s1205
        %s1207 = sand.u32 %s34, 1
        %s1208 = scalar_lea.sflag [#allocation10], %s1207
        %s1209 = sand.u32 %s209, 1
        %s1210 = smul.addr %s1209, 2
        %s1211 = scalar_lea.vmem [#allocation11], %s1210
        %s1212 = sand.u32 %s235, 1
        %s1213 = scalar_lea.sflag [#allocation13], %s1212
        %s1214 = sand.u32 %s235, 1
        %s1215 = scalar_lea.vmem [#allocation12], %s1214
        // Predicated region
        $region61: #{tpu_custom_call.1} parent=35 // pred_check
          %p1216 = pneg %p165
        $region62: #{tpu_custom_call.1} parent=35 // pred_check_branch
          %1218 = sbr.rel (%p1216) target = $region64
        $region63: #{tpu_custom_call.1} parent=35 // pred_region
          %s1219 = smul.u32 16, %s38
          %s1220 = smul.u32 2, %s39
          %s1222 = ssub.s32 4096, 4096
          %1223 = vsyncadd %s1198, %s1222
          %s1224 = smul.addr %s1219, 4
          %s1225 = sadd.s32 %s1220, %s1224
          %s1226 = smul.addr %s1225, 128
          %s1227 = scalar_lea.hbm %s4, %s1226
          %s1228 = sshll.u32 %s1201, 4
          %s1229 = int_to_ptr.vmem [resolvable:$true] %s1228
          %1234 = dma.vmem_to_hbm [thread:$0]  %s1229, 4096, %s1227, %s1198, 256, 512, 16
        $region64: #{tpu_custom_call.1} parent=35 // pred_fallthru
          _
        // Predicated region
        $region65: #{tpu_custom_call.1} parent=35 // pred_check
          %p1235 = pneg %p191
        $region66: #{tpu_custom_call.1} parent=35 // pred_check_branch
          %1237 = sbr.rel (%p1235) target = $region68
        $region67: #{tpu_custom_call.1} parent=35 // pred_region
          %s1238 = smul.u32 16, %s38
          %s1240 = ssub.s32 2048, 2048
          %1241 = vsyncadd %s1203, %s1240
          %s1242 = smul.addr %s1238, 128
          %s1243 = scalar_lea.hbm %s5, %s1242
          %s1244 = sshll.u32 %s1206, 4
          %s1245 = int_to_ptr.vmem [resolvable:$true] %s1244
          %1250 = dma.vmem_to_hbm [thread:$0]  %s1245, 2048, %s1243, %s1203, 128, 128, 8
        $region68: #{tpu_custom_call.1} parent=35 // pred_fallthru
          _
        // Predicated region
        $region69: #{tpu_custom_call.1} parent=35 // pred_check
          %p1251 = pneg %p219
        $region70: #{tpu_custom_call.1} parent=35 // pred_check_branch
          %1253 = sbr.rel (%p1251) target = $region72
        $region71: #{tpu_custom_call.1} parent=35 // pred_region
          %s1254 = smul.u32 2, %s39
          %s1256 = ssub.s32 32, 32
          %1257 = vsyncadd %s1208, %s1256
          %s1258 = smul.addr %s38, 4
          %s1259 = sadd.s32 %s1254, %s1258
          %s1260 = smul.addr %s1259, 16
          %s1261 = scalar_lea.hbm %s6, %s1260
          %s1263 = sshll.u32 %s1211, 4
          %s1264 = int_to_ptr.vmem [resolvable:$true] %s1263
          %1266 = dma.vmem_to_hbm [thread:$0]  %s1264, 32, %s1261, %s1208
        $region72: #{tpu_custom_call.1} parent=35 // pred_fallthru
          _
        // Predicated region
        $region73: #{tpu_custom_call.1} parent=35 // pred_check
          %p1267 = pneg %p245
        $region74: #{tpu_custom_call.1} parent=35 // pred_check_branch
          %1269 = sbr.rel (%p1267) target = $region76
        $region75: #{tpu_custom_call.1} parent=35 // pred_region
          %s1271 = ssub.s32 16, 16
          %1272 = vsyncadd %s1213, %s1271
          %s1273 = smul.addr %s38, 16
          %s1274 = scalar_lea.hbm %s7, %s1273
          %s1276 = sshll.u32 %s1215, 4
          %s1277 = int_to_ptr.vmem [resolvable:$true] %s1276
          %1279 = dma.vmem_to_hbm [thread:$0]  %s1277, 16, %s1274, %s1213
        $region76: #{tpu_custom_call.1} parent=35 // pred_fallthru
          _
      $region36: #{tpu_custom_call.1} parent=5 // pred_fallthru
        _
      %p1280 = scmp.le.s32.totalorder 2, %s29
      // Predicated region
      $region77: #{tpu_custom_call.1} parent=5 // pred_check
        %p1281 = pneg %p1280
      $region78: #{tpu_custom_call.1} parent=5 // pred_check_branch
        %1283 = sbr.rel (%p1281) target = $region80
      $region79: #{tpu_custom_call.1} parent=5 // pred_region
        %s1284 = ssub.s32 %s29, 2
        // Predicated region
        $region81: #{tpu_custom_call.1} parent=79 // pred_check
          %p1285 = pneg %p171
        $region82: #{tpu_custom_call.1} parent=79 // pred_check_branch
          %1287 = sbr.rel (%p1285) target = $region84
        $region83: #{tpu_custom_call.1} parent=79 // pred_region
          %s1288 = sand.u32 %s156, 1
          %s1289 = scalar_lea.sflag [#allocation4], %s1288
          %s1290 = sand.u32 %s156, 1
          %s1291 = smul.addr %s1290, 256
          %s1292 = scalar_lea.vmem [#allocation8], %s1291
          %1293 = dma.done %s1289, 4096
        $region84: #{tpu_custom_call.1} parent=79 // pred_fallthru
          _
        // Predicated region
        $region85: #{tpu_custom_call.1} parent=79 // pred_check
          %p1294 = pneg %p197
        $region86: #{tpu_custom_call.1} parent=79 // pred_check_branch
          %1296 = sbr.rel (%p1294) target = $region88
        $region87: #{tpu_custom_call.1} parent=79 // pred_region
          %s1297 = sand.u32 %s35, 1
          %s1298 = scalar_lea.sflag [#allocation10], %s1297
          %s1299 = sand.u32 %s182, 1
          %s1300 = smul.addr %s1299, 128
          %s1301 = scalar_lea.vmem [#allocation9], %s1300
          %1302 = dma.done %s1298, 2048
        $region88: #{tpu_custom_call.1} parent=79 // pred_fallthru
          _
        // Predicated region
        $region89: #{tpu_custom_call.1} parent=79 // pred_check
          %p1303 = pneg %p225
        $region90: #{tpu_custom_call.1} parent=79 // pred_check_branch
          %1305 = sbr.rel (%p1303) target = $region92
        $region91: #{tpu_custom_call.1} parent=79 // pred_region
          %s1306 = sand.u32 %s35, 1
          %s1307 = scalar_lea.sflag [#allocation10], %s1306
          %s1308 = sand.u32 %s210, 1
          %s1309 = smul.addr %s1308, 2
          %s1310 = scalar_lea.vmem [#allocation11], %s1309
          %1311 = dma.done %s1307, 32
        $region92: #{tpu_custom_call.1} parent=79 // pred_fallthru
          _
        // Predicated region
        $region93: #{tpu_custom_call.1} parent=79 // pred_check
          %p1312 = pneg %p251
        $region94: #{tpu_custom_call.1} parent=79 // pred_check_branch
          %1314 = sbr.rel (%p1312) target = $region96
        $region95: #{tpu_custom_call.1} parent=79 // pred_region
          %s1315 = sand.u32 %s236, 1
          %s1316 = scalar_lea.sflag [#allocation13], %s1315
          %s1317 = sand.u32 %s236, 1
          %s1318 = scalar_lea.vmem [#allocation12], %s1317
          %1319 = dma.done %s1316, 16
        $region96: #{tpu_custom_call.1} parent=79 // pred_fallthru
          _
      $region80: #{tpu_custom_call.1} parent=5 // pred_fallthru
        _
    $region6: #{tpu_custom_call.1} parent=1 // loop_footer
      %s33 = sadd.s32 1, %s29
    $region7: #{tpu_custom_call.1} parent=1 // loop_footer_branch
      %28 = sbr.rel target = $region3
    $region8: #{tpu_custom_call.1} parent=1 // loop_exit
      _
    %1320 = vsyncpa [#allocation3], 1
    %s1321 = scalar_lea.sflag [#allocation3], 1
    %1322 = vsyncpa %s1321, 1
    %1323 = vsyncpa [#allocation6], 1
    %s1324 = scalar_lea.sflag [#allocation6], 1
    %1325 = vsyncpa %s1324, 1
    %1326 = vsyncpa [#allocation4], 1
    %s1327 = scalar_lea.sflag [#allocation4], 1
    %1328 = vsyncpa %s1327, 1
    %1329 = vsyncpa [#allocation10], 1
    %s1330 = scalar_lea.sflag [#allocation10], 1
    %1331 = vsyncpa %s1330, 1
    %1332 = vsyncpa [#allocation13], 1
    %s1333 = scalar_lea.sflag [#allocation13], 1
    %1334 = vsyncpa %s1333, 1

</llo_original>
